<compile_context>
chip_gen: v5e
topology: v5e:2x2
jax: 0.10.0
libtpu: 0.0.40
codegen_flags: <defaults>
</compile_context>

<pallas_src>
import math

import jax
import jax.numpy as jnp
from jax import lax
from jax.experimental import pallas as pl
from jax.experimental.pallas import tpu as pltpu

HIDDEN = 256      # hidden_proj_dim (fixed at 256 in the module)
ATT = 64          # att_dim
NUM_ANS = 5
CHUNK = 8         # in-kernel partial-pool chunk == sublane tile height
_NEG = -1e30      # additive mask for padded rows (-inf would risk inf-inf NaNs)


def _gelu_tanh(x):
    # tanh-approximation GELU (cheap on v5e's VPU/EUP).
    c = math.sqrt(2.0 / math.pi)
    return 0.5 * x * (1.0 + jnp.tanh(c * (x + 0.044715 * (x * x * x))))


def _gelu_erf(x):
    # exact erf GELU (== torch.nn.GELU() default); used for the tiny jnp head
    # and for the reference.
    return 0.5 * x * (1.0 + lax.erf(x * (1.0 / math.sqrt(2.0))))


def _round_up(n, m):
    return ((n + m - 1) // m) * m


# ----------------------------------------------------------------------------
# Kernel: proj (Linear+GELU) -> Linear+GELU -> Linear+GELU -> max over every
#         consecutive 8 token rows (chunk maxima).
#   x    : (TM, D)      bf16 token rows, TM % 64 == 0
#   mask : (TM, 1)      f32, 0 for real tokens / -1e30 for padding
#   wp   : (1, D, 256)  bf16 projection weight slice selected per block by the
#                       scalar-prefetched modality id
#   out  : (TM/8, 64)   f32 chunk maxima
# ----------------------------------------------------------------------------
def mlp_chunkmax_kernel(mod_ref, x_ref, mask_ref, wp_ref, bp_ref,
                        w1_ref, b1_ref, w2_ref, b2_ref, o_ref):
    del mod_ref  # only consumed by the index_maps
    tm = x_ref.shape[0]

    h = jnp.dot(x_ref[...], wp_ref[0],
                preferred_element_type=jnp.float32) + bp_ref[0]
    h = _gelu_tanh(h)                                            # (TM, 256) f32

    t = jnp.dot(h.astype(jnp.bfloat16), w1_ref[...],
                preferred_element_type=jnp.float32) + b1_ref[...]
    t = _gelu_tanh(t)                                            # (TM, 128) f32

    u = jnp.dot(t.astype(jnp.bfloat16), w2_ref[...],
                preferred_element_type=jnp.float32) + b2_ref[...]
    u = _gelu_tanh(u) + mask_ref[...]                            # (TM, 64) f32

    # (TM,64)->(TM/8,8,64) is sublane-aligned (pure relabel); reduce the chunks.
    o_ref[...] = jnp.max(u.reshape(tm // CHUNK, CHUNK, -1), axis=1)


def _pick_tm(d_in, row_counts, *, budget_bytes=24 << 20, target_rows=1024):
    """Rows per grid step (multiple of 64 so the (TM/8,64) output block stays
    (8,128)-aligned).  Budgeted against total live VMEM (x double-buffer + f32
    intermediates + bf16 casts + double-buffered weights); aims for a big
    matmul M and >=2 grid steps (v7x megacore) whenever the data allows."""
    per_row = (2 * 2 * d_in                       # bf16 x block, double buffered
               + 4 * (HIDDEN + 2 * ATT + ATT)     # f32 h / t / u
               + 2 * (HIDDEN + 2 * ATT)           # bf16 casts of h / t
               + 2 * 4 + 64)                      # mask block + out share + slack
    w_bytes = (2 * 2 * (d_in * HIDDEN + HIDDEN * 2 * ATT + 2 * ATT * ATT)
               + 2 * 4 * (HIDDEN + 2 * ATT + ATT))
    cap = max(64, (budget_bytes - w_bytes) // per_row)
    half = _round_up(max(1, (sum(row_counts) + 1) // 2), 64)
    tm = min(target_rows, cap, half)
    return max(64, (tm // 64) * 64)


def _flatten_tokens(x):
    """(G, L, D) -> ((G*Lp, D) bf16 tokens, (G*Lp, 1) f32 additive mask, G, Lp)
    with Lp = L rounded up to a multiple of 8 (done in the wrapper, in HBM)."""
    G, L, D = x.shape
    Lp = _round_up(L, CHUNK)
    xp = jnp.pad(x, ((0, 0), (0, Lp - L), (0, 0)))
    tokens = xp.reshape(G * Lp, D).astype(jnp.bfloat16)
    mrow = jnp.where(jnp.arange(Lp) < L, 0.0, _NEG).astype(jnp.float32)
    mask = jnp.broadcast_to(mrow, (G, Lp)).reshape(G * Lp, 1)
    return tokens, mask, G, Lp


def _fused_mlp_chunkmax(tokens_list, mask_list, wp_list, bp_list, w1, b1, w2, b2):
    """Single pallas_call over all modalities that share an input dim.

    Each modality's flattened token rows are padded to a multiple of the block
    row count TM and concatenated; a scalar-prefetched per-block modality id
    drives the index_map of the stacked projection weights.  Returns the
    (total_rows/8, 64) chunk maxima and the per-modality chunk offsets."""
    D = tokens_list[0].shape[1]
    TM = _pick_tm(D, [t.shape[0] for t in tokens_list])

    toks, masks, mod_ids, chunk_offsets = [], [], [], []
    row_off = 0
    for m, (t, mk) in enumerate(zip(tokens_list, mask_list)):
        R = t.shape[0]
        Rp = _round_up(R, TM)
        toks.append(jnp.pad(t, ((0, Rp - R), (0, 0))))
        masks.append(jnp.pad(mk, ((0, Rp - R), (0, 0)), constant_values=_NEG))
        mod_ids += [m] * (Rp // TM)
        chunk_offsets.append(row_off // CHUNK)
        row_off += Rp

    x_all = jnp.concatenate(toks, axis=0)                      # (R_total, D) bf16
    mask_all = jnp.concatenate(masks, axis=0)                  # (R_total, 1) f32
    wp_all = jnp.stack(wp_list, axis=0)                        # (n_mod, D, 256) bf16
    bp_all = jnp.stack(bp_list, axis=0)                        # (n_mod, 1, 256) f32
    mod_id = jnp.asarray(mod_ids, dtype=jnp.int32)             # (n_blocks,)

    R_total = x_all.shape[0]
    n_blocks = R_total // TM

    chunkmax = pl.pallas_call(
        mlp_chunkmax_kernel,
        out_shape=jax.ShapeDtypeStruct((R_total // CHUNK, ATT), jnp.float32),
        grid_spec=pltpu.PrefetchScalarGridSpec(
            num_scalar_prefetch=1,
            grid=(n_blocks,),
            in_specs=[
                pl.BlockSpec((TM, D), lambda i, mid: (i, 0)),
                pl.BlockSpec((TM, 1), lambda i, mid: (i, 0)),
                pl.BlockSpec((1, D, HIDDEN), lambda i, mid: (mid[i], 0, 0)),
                pl.BlockSpec((1, 1, HIDDEN), lambda i, mid: (mid[i], 0, 0)),
                pl.BlockSpec((HIDDEN, 2 * ATT), lambda i, mid: (0, 0)),
                pl.BlockSpec((1, 2 * ATT), lambda i, mid: (0, 0)),
                pl.BlockSpec((2 * ATT, ATT), lambda i, mid: (0, 0)),
                pl.BlockSpec((1, ATT), lambda i, mid: (0, 0)),
            ],
            out_specs=pl.BlockSpec((TM // CHUNK, ATT), lambda i, mid: (i, 0)),
        ),
        compiler_params=pltpu.CompilerParams(
            dimension_semantics=("parallel",),
            vmem_limit_bytes=48 << 20,
        ),
    )(mod_id, x_all, mask_all, wp_all, bp_all, w1, b1, w2, b2)
    return chunkmax, chunk_offsets


# ----------------------------------------------------------------------------
# Parameters (deterministic synthetic init; Linear weights stored (in, out))
# ----------------------------------------------------------------------------
def init_params(key, q_dim, a_dim, s_dim, v_dim):
    names_shapes = [
        ('w_quest', (q_dim, HIDDEN)), ('b_quest', (1, HIDDEN)),
        ('w_ans',   (a_dim, HIDDEN)), ('b_ans',   (1, HIDDEN)),
        ('w_subt',  (s_dim, HIDDEN)), ('b_subt',  (1, HIDDEN)),
        ('w_vid',   (v_dim, HIDDEN)), ('b_vid',   (1, HIDDEN)),
        ('w_lin1', (HIDDEN, 2 * ATT)), ('b_lin1', (1, 2 * ATT)),
        ('w_lin2', (2 * ATT, ATT)),    ('b_lin2', (1, ATT)),
        ('w_cls1', (2 * ATT, ATT)),    ('b_cls1', (1, ATT)),
        ('w_cls2', (ATT, 1)),          ('b_cls2', (1, 1)),
    ]
    keys = jax.random.split(key, len(names_shapes))
    return {name: 0.05 * jax.random.normal(k, shape, dtype=jnp.float32)
            for (name, shape), k in zip(names_shapes, keys)}


# ----------------------------------------------------------------------------
# Full forward pass (fused Pallas launches + tiny plain-jnp finish / head)
# ----------------------------------------------------------------------------
def forward(question, answers, subt, vid, p):
    B = question.shape[0]
    NA = len(answers)

    def w16(name):
        return p[name].astype(jnp.bfloat16)

    # All 5 answers folded into the row (matmul M) dimension.
    ans = jnp.stack(answers, axis=0).reshape(
        NA * B, answers[0].shape[1], answers[0].shape[2])

    modalities = [
        ('quest', question, w16('w_quest'), p['b_quest']),
        ('ans',   ans,      w16('w_ans'),   p['b_ans']),
        ('subt',  subt,     w16('w_subt'),  p['b_subt']),
        ('vid',   vid,      w16('w_vid'),   p['b_vid']),
    ]

    # Group modalities by input feature dim so each fused launch has one static
    # contraction dim (q/a/subt share 768 in the reference module; video is
    # 2048 and gets its own launch instead of being zero-padded up).
    groups = {}
    for tag, x, wp, bp in modalities:
        tokens, mask, G, Lp = _flatten_tokens(x)
        groups.setdefault(x.shape[2], []).append((tag, tokens, mask, wp, bp, G, Lp))

    lin = (w16('w_lin1'), p['b_lin1'], w16('w_lin2'), p['b_lin2'])

    pooled = {}
    for segs in groups.values():
        chunkmax, offs = _fused_mlp_chunkmax(
            [s[1] for s in segs], [s[2] for s in segs],
            [s[3] for s in segs], [s[4] for s in segs], *lin)
        for (tag, _, _, _, _, G, Lp), off in zip(segs, offs):
            nc = G * Lp // CHUNK
            pooled[tag] = jnp.max(
                chunkmax[off:off + nc].reshape(G, Lp // CHUNK, ATT), axis=1)

    pq = pooled['quest'][None]                  # (1, B, 64)
    ps = pooled['subt'][None]
    pv = pooled['vid'][None]
    pa = pooled['ans'].reshape(NA, B, ATT)      # (5, B, 64)

    # == max over seq of linear(cat(q, a_i, subt)) / linear(cat(q, a_i, vid)).
    sub_feat = jnp.maximum(jnp.maximum(pq, pa), ps)
    vid_feat = jnp.maximum(jnp.maximum(pq, pa), pv)

    # Tiny classifier head in plain f32 jnp (a separate Pallas launch here
    # costs more than it saves; XLA fuses this).
    feat = jnp.concatenate([sub_feat, vid_feat], axis=-1)        # (5, B, 128)
    h = _gelu_erf(feat @ p['w_cls1'] + p['b_cls1'][0])
    score = (h @ p['w_cls2'] + p['b_cls2'][0])[..., 0]           # (5, B)
    return score.T                                               # (B, 5)


# ----------------------------------------------------------------------------
# Pure-JAX f32 reference following the PyTorch forward literally
# (concatenate along seq, run `linear` on the whole sequence, max over seq).
# ----------------------------------------------------------------------------
def ref_forward(question, answers, subt, vid, p):
    def lin(x, w, b):
        return x @ w + b[0]

    def proj(x, w, b):
        return _gelu_erf(lin(x, w, b))

    def linear_mod(x):
        return _gelu_erf(lin(_gelu_erf(lin(x, p['w_lin1'], p['b_lin1'])),
                             p['w_lin2'], p['b_lin2']))

    def cls(x):
        return lin(_gelu_erf(lin(x, p['w_cls1'], p['b_cls1'])), p['w_cls2'], p['b_cls2'])

    q_fwd = proj(question, p['w_quest'], p['b_quest'])
    s_fwd = proj(subt, p['w_subt'], p['b_subt'])
    v_fwd = proj(vid, p['w_vid'], p['b_vid'])
    a_fwd = [proj(a, p['w_ans'], p['b_ans']) for a in answers]

    scores = []
    for af in a_fwd:
        qas = jnp.concatenate([q_fwd, af, s_fwd], axis=1)
        qav = jnp.concatenate([q_fwd, af, v_fwd], axis=1)
        s_lin = jnp.max(linear_mod(qas), axis=1)
        v_lin = jnp.max(linear_mod(qav), axis=1)
        scores.append(cls(jnp.concatenate([s_lin, v_lin], axis=1)))
    return jnp.concatenate(scores, axis=1)                       # (B, 5)


if __name__ == "__main__":
    # Small shapes consistent with the module's forward (3-D batch_first
    # sequences); lengths deliberately NOT multiples of 8 to exercise the
    # padding / masking path, and vid_dim different to exercise both launches.
    B, Lq, La, Ls, Lv = 2, 9, 4, 19, 12
    Q_DIM = A_DIM = S_DIM = 128
    V_DIM = 256

    key = jax.random.PRNGKey(0)
    ks = jax.random.split(key, 8)
    question = jax.random.normal(ks[0], (B, Lq, Q_DIM), dtype=jnp.float32)
    answers = [jax.random.normal(ks[1 + i], (B, La, A_DIM), dtype=jnp.float32)
               for i in range(NUM_ANS)]
    subt = jax.random.normal(ks[6], (B, Ls, S_DIM), dtype=jnp.float32)
    vid = jax.random.normal(ks[7], (B, Lv, V_DIM), dtype=jnp.float32)

    params = init_params(jax.random.PRNGKey(42), Q_DIM, A_DIM, S_DIM, V_DIM)

    fwd = jax.jit(forward)
    logits = jax.block_until_ready(fwd(question, answers, subt, vid, params))
    assert logits.shape == (B, NUM_ANS), logits.shape

    ref = ref_forward(question, answers, subt, vid, params)
    # bf16 MXU operands (f32 accumulation) + tanh-approx GELU in the kernel vs
    # the all-f32 exact-erf reference -> relaxed tolerance (intentional).
    if not bool(jnp.allclose(logits, ref, atol=2e-2, rtol=2e-2)):
        raise RuntimeError(f"mismatch: pallas={logits}, ref={ref}")

    print("KERNEL_OK")
</pallas_src>

<mosaic_0001>
module attributes {stable_mosaic.version = 11 : i64} {
  func.func @mlp_chunkmax_kernel(%arg0: i32, %arg1: memref<3xi32, #tpu.memory_space<smem>>, %arg2: memref<128x128xbf16, #tpu.memory_space<vmem>>, %arg3: memref<128x1xf32, #tpu.memory_space<vmem>>, %arg4: memref<1x128x256xbf16, #tpu.memory_space<vmem>>, %arg5: memref<1x1x256xf32, #tpu.memory_space<vmem>>, %arg6: memref<256x128xbf16, #tpu.memory_space<vmem>>, %arg7: memref<1x128xf32, #tpu.memory_space<vmem>>, %arg8: memref<128x64xbf16, #tpu.memory_space<vmem>>, %arg9: memref<1x64xf32, #tpu.memory_space<vmem>>, %arg10: memref<16x64xf32, #tpu.memory_space<vmem>>) attributes {dimension_semantics = [#tpu.dimension_semantics<parallel>], iteration_bounds = array<i64: 3>, scalar_prefetch = 1 : i64, scratch_operands = 0 : i64, tpu.core_type = #tpu.core_type<tc>, window_params = [{transform_indices = @transform_0, window_bounds = array<i64: 128, 128>}, {transform_indices = @transform_1, window_bounds = array<i64: 128, 1>}, {transform_indices = @transform_2, window_bounds = array<i64: 1, 128, 256>}, {transform_indices = @transform_3, window_bounds = array<i64: 1, 1, 256>}, {pipeline_mode = #tpu.pipeline_mode<synchronous>, transform_indices = @transform_4, window_bounds = array<i64: 256, 128>}, {pipeline_mode = #tpu.pipeline_mode<synchronous>, transform_indices = @transform_5, window_bounds = array<i64: 1, 128>}, {pipeline_mode = #tpu.pipeline_mode<synchronous>, transform_indices = @transform_6, window_bounds = array<i64: 128, 64>}, {pipeline_mode = #tpu.pipeline_mode<synchronous>, transform_indices = @transform_7, window_bounds = array<i64: 1, 64>}, {transform_indices = @transform_8, window_bounds = array<i64: 16, 64>}]} {
    %c0 = arith.constant 0 : index
    %c0_0 = arith.constant 0 : index
    %0 = vector.load %arg2[%c0, %c0_0] : memref<128x128xbf16, #tpu.memory_space<vmem>>, vector<128x128xbf16>
    %c0_1 = arith.constant 0 : index
    %c0_2 = arith.constant 0 : index
    %c0_3 = arith.constant 0 : index
    %1 = vector.load %arg4[%c0_1, %c0_2, %c0_3] : memref<1x128x256xbf16, #tpu.memory_space<vmem>>, vector<1x128x256xbf16>
    %2 = vector.shape_cast %1 : vector<1x128x256xbf16> to vector<128x256xbf16>
    %cst = arith.constant dense<0.000000e+00> : vector<128x256xf32>
    %3 = tpu.matmul %0, %2, %cst {dimension_numbers = #tpu.dot_dimension_numbers<[1], [0], [0], [1], [0, 0, 1, 1], [], []>} : vector<128x128xbf16>, vector<128x256xbf16>, vector<128x256xf32> -> vector<128x256xf32>
    %c0_4 = arith.constant 0 : index
    %c0_5 = arith.constant 0 : index
    %c0_6 = arith.constant 0 : index
    %4 = vector.load %arg5[%c0_4, %c0_5, %c0_6] : memref<1x1x256xf32, #tpu.memory_space<vmem>>, vector<1x1x256xf32>
    %5 = vector.shape_cast %4 : vector<1x1x256xf32> to vector<1x256xf32>
    %6 = vector.broadcast %5 : vector<1x256xf32> to vector<128x256xf32>
    %7 = arith.addf %3, %6 : vector<128x256xf32>
    %cst_7 = arith.constant 5.000000e-01 : f32
    %8 = vector.broadcast %cst_7 : f32 to vector<128x256xf32>
    %9 = arith.mulf %8, %7 : vector<128x256xf32>
    %10 = arith.mulf %7, %7 : vector<128x256xf32>
    %11 = arith.mulf %10, %7 : vector<128x256xf32>
    %cst_8 = arith.constant 4.471500e-02 : f32
    %12 = vector.broadcast %cst_8 : f32 to vector<128x256xf32>
    %13 = arith.mulf %12, %11 : vector<128x256xf32>
    %14 = arith.addf %7, %13 : vector<128x256xf32>
    %cst_9 = arith.constant 0.797884583 : f32
    %15 = vector.broadcast %cst_9 : f32 to vector<128x256xf32>
    %16 = arith.mulf %15, %14 : vector<128x256xf32>
    %17 = math.tanh %16 : vector<128x256xf32>
    %cst_10 = arith.constant 1.000000e+00 : f32
    %18 = vector.broadcast %cst_10 : f32 to vector<128x256xf32>
    %19 = arith.addf %18, %17 : vector<128x256xf32>
    %20 = arith.mulf %9, %19 : vector<128x256xf32>
    %21 = arith.truncf %20 : vector<128x256xf32> to vector<128x256xbf16>
    %c0_11 = arith.constant 0 : index
    %c0_12 = arith.constant 0 : index
    %22 = vector.load %arg6[%c0_11, %c0_12] : memref<256x128xbf16, #tpu.memory_space<vmem>>, vector<256x128xbf16>
    %cst_13 = arith.constant dense<0.000000e+00> : vector<128x128xf32>
    %23 = tpu.matmul %21, %22, %cst_13 {dimension_numbers = #tpu.dot_dimension_numbers<[1], [0], [0], [1], [0, 0, 1, 1], [], []>} : vector<128x256xbf16>, vector<256x128xbf16>, vector<128x128xf32> -> vector<128x128xf32>
    %c0_14 = arith.constant 0 : index
    %c0_15 = arith.constant 0 : index
    %24 = vector.load %arg7[%c0_14, %c0_15] : memref<1x128xf32, #tpu.memory_space<vmem>>, vector<1x128xf32>
    %25 = vector.broadcast %24 : vector<1x128xf32> to vector<128x128xf32>
    %26 = arith.addf %23, %25 : vector<128x128xf32>
    %cst_16 = arith.constant 5.000000e-01 : f32
    %27 = vector.broadcast %cst_16 : f32 to vector<128x128xf32>
    %28 = arith.mulf %27, %26 : vector<128x128xf32>
    %29 = arith.mulf %26, %26 : vector<128x128xf32>
    %30 = arith.mulf %29, %26 : vector<128x128xf32>
    %cst_17 = arith.constant 4.471500e-02 : f32
    %31 = vector.broadcast %cst_17 : f32 to vector<128x128xf32>
    %32 = arith.mulf %31, %30 : vector<128x128xf32>
    %33 = arith.addf %26, %32 : vector<128x128xf32>
    %cst_18 = arith.constant 0.797884583 : f32
    %34 = vector.broadcast %cst_18 : f32 to vector<128x128xf32>
    %35 = arith.mulf %34, %33 : vector<128x128xf32>
    %36 = math.tanh %35 : vector<128x128xf32>
    %cst_19 = arith.constant 1.000000e+00 : f32
    %37 = vector.broadcast %cst_19 : f32 to vector<128x128xf32>
    %38 = arith.addf %37, %36 : vector<128x128xf32>
    %39 = arith.mulf %28, %38 : vector<128x128xf32>
    %40 = arith.truncf %39 : vector<128x128xf32> to vector<128x128xbf16>
    %c0_20 = arith.constant 0 : index
    %c0_21 = arith.constant 0 : index
    %41 = vector.load %arg8[%c0_20, %c0_21] : memref<128x64xbf16, #tpu.memory_space<vmem>>, vector<128x64xbf16>
    %cst_22 = arith.constant dense<0.000000e+00> : vector<128x64xf32>
    %42 = tpu.matmul %40, %41, %cst_22 {dimension_numbers = #tpu.dot_dimension_numbers<[1], [0], [0], [1], [0, 0, 1, 1], [], []>} : vector<128x128xbf16>, vector<128x64xbf16>, vector<128x64xf32> -> vector<128x64xf32>
    %c0_23 = arith.constant 0 : index
    %c0_24 = arith.constant 0 : index
    %43 = vector.load %arg9[%c0_23, %c0_24] : memref<1x64xf32, #tpu.memory_space<vmem>>, vector<1x64xf32>
    %44 = vector.broadcast %43 : vector<1x64xf32> to vector<128x64xf32>
    %45 = arith.addf %42, %44 : vector<128x64xf32>
    %cst_25 = arith.constant 5.000000e-01 : f32
    %46 = vector.broadcast %cst_25 : f32 to vector<128x64xf32>
    %47 = arith.mulf %46, %45 : vector<128x64xf32>
    %48 = arith.mulf %45, %45 : vector<128x64xf32>
    %49 = arith.mulf %48, %45 : vector<128x64xf32>
    %cst_26 = arith.constant 4.471500e-02 : f32
    %50 = vector.broadcast %cst_26 : f32 to vector<128x64xf32>
    %51 = arith.mulf %50, %49 : vector<128x64xf32>
    %52 = arith.addf %45, %51 : vector<128x64xf32>
    %cst_27 = arith.constant 0.797884583 : f32
    %53 = vector.broadcast %cst_27 : f32 to vector<128x64xf32>
    %54 = arith.mulf %53, %52 : vector<128x64xf32>
    %55 = math.tanh %54 : vector<128x64xf32>
    %cst_28 = arith.constant 1.000000e+00 : f32
    %56 = vector.broadcast %cst_28 : f32 to vector<128x64xf32>
    %57 = arith.addf %56, %55 : vector<128x64xf32>
    %58 = arith.mulf %47, %57 : vector<128x64xf32>
    %c0_29 = arith.constant 0 : index
    %c0_30 = arith.constant 0 : index
    %59 = vector.load %arg3[%c0_29, %c0_30] : memref<128x1xf32, #tpu.memory_space<vmem>>, vector<128x1xf32>
    %60 = vector.broadcast %59 : vector<128x1xf32> to vector<128x64xf32>
    %61 = arith.addf %58, %60 : vector<128x64xf32>
    %62 = vector.shape_cast %61 : vector<128x64xf32> to vector<16x8x64xf32>
    %cst_31 = arith.constant dense<0xFF800000> : vector<16x64xf32>
    %63 = vector.multi_reduction <maximumf>, %62, %cst_31 [1] : vector<16x8x64xf32> to vector<16x64xf32>
    %c0_32 = arith.constant 0 : index
    %c0_33 = arith.constant 0 : index
    %64 = vector.load %arg10[%c0_32, %c0_33] : memref<16x64xf32, #tpu.memory_space<vmem>>, vector<16x64xf32>
    tpu.vector_store %arg10[%c0_32, %c0_33], %63 {strides = array<i32>} : memref<16x64xf32, #tpu.memory_space<vmem>>, vector<16x64xf32>,
    return
  }
  func.func @transform_0(%arg0: i32, %arg1: memref<3xi32, #tpu.memory_space<smem>>) -> (i32, i32) {
    %c0_i32 = arith.constant 0 : i32
    %c0_i32_0 = arith.constant 0 : i32
    return %arg0, %c0_i32 : i32, i32
  }
  func.func @transform_1(%arg0: i32, %arg1: memref<3xi32, #tpu.memory_space<smem>>) -> (i32, i32) {
    %c0_i32 = arith.constant 0 : i32
    %c0_i32_0 = arith.constant 0 : i32
    return %arg0, %c0_i32 : i32, i32
  }
  func.func @transform_2(%arg0: i32, %arg1: memref<3xi32, #tpu.memory_space<smem>>) -> (i32, i32, i32) {
    %0 = arith.index_cast %arg0 : i32 to index
    %1 = memref.load %arg1[%0] : memref<3xi32, #tpu.memory_space<smem>>
    %c0_i32 = arith.constant 0 : i32
    %c0_i32_0 = arith.constant 0 : i32
    %c0_i32_1 = arith.constant 0 : i32
    return %1, %c0_i32, %c0_i32_0 : i32, i32, i32
  }
  func.func @transform_3(%arg0: i32, %arg1: memref<3xi32, #tpu.memory_space<smem>>) -> (i32, i32, i32) {
    %0 = arith.index_cast %arg0 : i32 to index
    %1 = memref.load %arg1[%0] : memref<3xi32, #tpu.memory_space<smem>>
    %c0_i32 = arith.constant 0 : i32
    %c0_i32_0 = arith.constant 0 : i32
    %c0_i32_1 = arith.constant 0 : i32
    return %1, %c0_i32, %c0_i32_0 : i32, i32, i32
  }
  func.func @transform_4(%arg0: i32, %arg1: memref<3xi32, #tpu.memory_space<smem>>) -> (i32, i32) {
    %c0_i32 = arith.constant 0 : i32
    %c0_i32_0 = arith.constant 0 : i32
    %c0_i32_1 = arith.constant 0 : i32
    return %c0_i32, %c0_i32_0 : i32, i32
  }
  func.func @transform_5(%arg0: i32, %arg1: memref<3xi32, #tpu.memory_space<smem>>) -> (i32, i32) {
    %c0_i32 = arith.constant 0 : i32
    %c0_i32_0 = arith.constant 0 : i32
    %c0_i32_1 = arith.constant 0 : i32
    return %c0_i32, %c0_i32_0 : i32, i32
  }
  func.func @transform_6(%arg0: i32, %arg1: memref<3xi32, #tpu.memory_space<smem>>) -> (i32, i32) {
    %c0_i32 = arith.constant 0 : i32
    %c0_i32_0 = arith.constant 0 : i32
    %c0_i32_1 = arith.constant 0 : i32
    return %c0_i32, %c0_i32_0 : i32, i32
  }
  func.func @transform_7(%arg0: i32, %arg1: memref<3xi32, #tpu.memory_space<smem>>) -> (i32, i32) {
    %c0_i32 = arith.constant 0 : i32
    %c0_i32_0 = arith.constant 0 : i32
    %c0_i32_1 = arith.constant 0 : i32
    return %c0_i32, %c0_i32_0 : i32, i32
  }
  func.func @transform_8(%arg0: i32, %arg1: memref<3xi32, #tpu.memory_space<smem>>) -> (i32, i32) {
    %c0_i32 = arith.constant 0 : i32
    %c0_i32_0 = arith.constant 0 : i32
    return %arg0, %c0_i32 : i32, i32
  }
}

module attributes {stable_mosaic.version = 11 : i64} {
  func.func @mlp_chunkmax_kernel(%arg0: i32, %arg1: memref<1xi32, #tpu.memory_space<smem>>, %arg2: memref<64x256xbf16, #tpu.memory_space<vmem>>, %arg3: memref<64x1xf32, #tpu.memory_space<vmem>>, %arg4: memref<1x256x256xbf16, #tpu.memory_space<vmem>>, %arg5: memref<1x1x256xf32, #tpu.memory_space<vmem>>, %arg6: memref<256x128xbf16, #tpu.memory_space<vmem>>, %arg7: memref<1x128xf32, #tpu.memory_space<vmem>>, %arg8: memref<128x64xbf16, #tpu.memory_space<vmem>>, %arg9: memref<1x64xf32, #tpu.memory_space<vmem>>, %arg10: memref<8x64xf32, #tpu.memory_space<vmem>>) attributes {dimension_semantics = [#tpu.dimension_semantics<parallel>], iteration_bounds = array<i64: 1>, scalar_prefetch = 1 : i64, scratch_operands = 0 : i64, tpu.core_type = #tpu.core_type<tc>, window_params = [{transform_indices = @transform_0, window_bounds = array<i64: 64, 256>}, {transform_indices = @transform_1, window_bounds = array<i64: 64, 1>}, {transform_indices = @transform_2, window_bounds = array<i64: 1, 256, 256>}, {transform_indices = @transform_3, window_bounds = array<i64: 1, 1, 256>}, {pipeline_mode = #tpu.pipeline_mode<synchronous>, transform_indices = @transform_4, window_bounds = array<i64: 256, 128>}, {pipeline_mode = #tpu.pipeline_mode<synchronous>, transform_indices = @transform_5, window_bounds = array<i64: 1, 128>}, {pipeline_mode = #tpu.pipeline_mode<synchronous>, transform_indices = @transform_6, window_bounds = array<i64: 128, 64>}, {pipeline_mode = #tpu.pipeline_mode<synchronous>, transform_indices = @transform_7, window_bounds = array<i64: 1, 64>}, {transform_indices = @transform_8, window_bounds = array<i64: 8, 64>}]} {
    %c0 = arith.constant 0 : index
    %c0_0 = arith.constant 0 : index
    %0 = vector.load %arg2[%c0, %c0_0] : memref<64x256xbf16, #tpu.memory_space<vmem>>, vector<64x256xbf16>
    %c0_1 = arith.constant 0 : index
    %c0_2 = arith.constant 0 : index
    %c0_3 = arith.constant 0 : index
    %1 = vector.load %arg4[%c0_1, %c0_2, %c0_3] : memref<1x256x256xbf16, #tpu.memory_space<vmem>>, vector<1x256x256xbf16>
    %2 = vector.shape_cast %1 : vector<1x256x256xbf16> to vector<256x256xbf16>
    %cst = arith.constant dense<0.000000e+00> : vector<64x256xf32>
    %3 = tpu.matmul %0, %2, %cst {dimension_numbers = #tpu.dot_dimension_numbers<[1], [0], [0], [1], [0, 0, 1, 1], [], []>} : vector<64x256xbf16>, vector<256x256xbf16>, vector<64x256xf32> -> vector<64x256xf32>
    %c0_4 = arith.constant 0 : index
    %c0_5 = arith.constant 0 : index
    %c0_6 = arith.constant 0 : index
    %4 = vector.load %arg5[%c0_4, %c0_5, %c0_6] : memref<1x1x256xf32, #tpu.memory_space<vmem>>, vector<1x1x256xf32>
    %5 = vector.shape_cast %4 : vector<1x1x256xf32> to vector<1x256xf32>
    %6 = vector.broadcast %5 : vector<1x256xf32> to vector<64x256xf32>
    %7 = arith.addf %3, %6 : vector<64x256xf32>
    %cst_7 = arith.constant 5.000000e-01 : f32
    %8 = vector.broadcast %cst_7 : f32 to vector<64x256xf32>
    %9 = arith.mulf %8, %7 : vector<64x256xf32>
    %10 = arith.mulf %7, %7 : vector<64x256xf32>
    %11 = arith.mulf %10, %7 : vector<64x256xf32>
    %cst_8 = arith.constant 4.471500e-02 : f32
    %12 = vector.broadcast %cst_8 : f32 to vector<64x256xf32>
    %13 = arith.mulf %12, %11 : vector<64x256xf32>
    %14 = arith.addf %7, %13 : vector<64x256xf32>
    %cst_9 = arith.constant 0.797884583 : f32
    %15 = vector.broadcast %cst_9 : f32 to vector<64x256xf32>
    %16 = arith.mulf %15, %14 : vector<64x256xf32>
    %17 = math.tanh %16 : vector<64x256xf32>
    %cst_10 = arith.constant 1.000000e+00 : f32
    %18 = vector.broadcast %cst_10 : f32 to vector<64x256xf32>
    %19 = arith.addf %18, %17 : vector<64x256xf32>
    %20 = arith.mulf %9, %19 : vector<64x256xf32>
    %21 = arith.truncf %20 : vector<64x256xf32> to vector<64x256xbf16>
    %c0_11 = arith.constant 0 : index
    %c0_12 = arith.constant 0 : index
    %22 = vector.load %arg6[%c0_11, %c0_12] : memref<256x128xbf16, #tpu.memory_space<vmem>>, vector<256x128xbf16>
    %cst_13 = arith.constant dense<0.000000e+00> : vector<64x128xf32>
    %23 = tpu.matmul %21, %22, %cst_13 {dimension_numbers = #tpu.dot_dimension_numbers<[1], [0], [0], [1], [0, 0, 1, 1], [], []>} : vector<64x256xbf16>, vector<256x128xbf16>, vector<64x128xf32> -> vector<64x128xf32>
    %c0_14 = arith.constant 0 : index
    %c0_15 = arith.constant 0 : index
    %24 = vector.load %arg7[%c0_14, %c0_15] : memref<1x128xf32, #tpu.memory_space<vmem>>, vector<1x128xf32>
    %25 = vector.broadcast %24 : vector<1x128xf32> to vector<64x128xf32>
    %26 = arith.addf %23, %25 : vector<64x128xf32>
    %cst_16 = arith.constant 5.000000e-01 : f32
    %27 = vector.broadcast %cst_16 : f32 to vector<64x128xf32>
    %28 = arith.mulf %27, %26 : vector<64x128xf32>
    %29 = arith.mulf %26, %26 : vector<64x128xf32>
    %30 = arith.mulf %29, %26 : vector<64x128xf32>
    %cst_17 = arith.constant 4.471500e-02 : f32
    %31 = vector.broadcast %cst_17 : f32 to vector<64x128xf32>
    %32 = arith.mulf %31, %30 : vector<64x128xf32>
    %33 = arith.addf %26, %32 : vector<64x128xf32>
    %cst_18 = arith.constant 0.797884583 : f32
    %34 = vector.broadcast %cst_18 : f32 to vector<64x128xf32>
    %35 = arith.mulf %34, %33 : vector<64x128xf32>
    %36 = math.tanh %35 : vector<64x128xf32>
    %cst_19 = arith.constant 1.000000e+00 : f32
    %37 = vector.broadcast %cst_19 : f32 to vector<64x128xf32>
    %38 = arith.addf %37, %36 : vector<64x128xf32>
    %39 = arith.mulf %28, %38 : vector<64x128xf32>
    %40 = arith.truncf %39 : vector<64x128xf32> to vector<64x128xbf16>
    %c0_20 = arith.constant 0 : index
    %c0_21 = arith.constant 0 : index
    %41 = vector.load %arg8[%c0_20, %c0_21] : memref<128x64xbf16, #tpu.memory_space<vmem>>, vector<128x64xbf16>
    %cst_22 = arith.constant dense<0.000000e+00> : vector<64x64xf32>
    %42 = tpu.matmul %40, %41, %cst_22 {dimension_numbers = #tpu.dot_dimension_numbers<[1], [0], [0], [1], [0, 0, 1, 1], [], []>} : vector<64x128xbf16>, vector<128x64xbf16>, vector<64x64xf32> -> vector<64x64xf32>
    %c0_23 = arith.constant 0 : index
    %c0_24 = arith.constant 0 : index
    %43 = vector.load %arg9[%c0_23, %c0_24] : memref<1x64xf32, #tpu.memory_space<vmem>>, vector<1x64xf32>
    %44 = vector.broadcast %43 : vector<1x64xf32> to vector<64x64xf32>
    %45 = arith.addf %42, %44 : vector<64x64xf32>
    %cst_25 = arith.constant 5.000000e-01 : f32
    %46 = vector.broadcast %cst_25 : f32 to vector<64x64xf32>
    %47 = arith.mulf %46, %45 : vector<64x64xf32>
    %48 = arith.mulf %45, %45 : vector<64x64xf32>
    %49 = arith.mulf %48, %45 : vector<64x64xf32>
    %cst_26 = arith.constant 4.471500e-02 : f32
    %50 = vector.broadcast %cst_26 : f32 to vector<64x64xf32>
    %51 = arith.mulf %50, %49 : vector<64x64xf32>
    %52 = arith.addf %45, %51 : vector<64x64xf32>
    %cst_27 = arith.constant 0.797884583 : f32
    %53 = vector.broadcast %cst_27 : f32 to vector<64x64xf32>
    %54 = arith.mulf %53, %52 : vector<64x64xf32>
    %55 = math.tanh %54 : vector<64x64xf32>
    %cst_28 = arith.constant 1.000000e+00 : f32
    %56 = vector.broadcast %cst_28 : f32 to vector<64x64xf32>
    %57 = arith.addf %56, %55 : vector<64x64xf32>
    %58 = arith.mulf %47, %57 : vector<64x64xf32>
    %c0_29 = arith.constant 0 : index
    %c0_30 = arith.constant 0 : index
    %59 = vector.load %arg3[%c0_29, %c0_30] : memref<64x1xf32, #tpu.memory_space<vmem>>, vector<64x1xf32>
    %60 = vector.broadcast %59 : vector<64x1xf32> to vector<64x64xf32>
    %61 = arith.addf %58, %60 : vector<64x64xf32>
    %62 = vector.shape_cast %61 : vector<64x64xf32> to vector<8x8x64xf32>
    %cst_31 = arith.constant dense<0xFF800000> : vector<8x64xf32>
    %63 = vector.multi_reduction <maximumf>, %62, %cst_31 [1] : vector<8x8x64xf32> to vector<8x64xf32>
    %c0_32 = arith.constant 0 : index
    %c0_33 = arith.constant 0 : index
    %64 = vector.load %arg10[%c0_32, %c0_33] : memref<8x64xf32, #tpu.memory_space<vmem>>, vector<8x64xf32>
    tpu.vector_store %arg10[%c0_32, %c0_33], %63 {strides = array<i32>} : memref<8x64xf32, #tpu.memory_space<vmem>>, vector<8x64xf32>,
    return
  }
  func.func @transform_0(%arg0: i32, %arg1: memref<1xi32, #tpu.memory_space<smem>>) -> (i32, i32) {
    %c0_i32 = arith.constant 0 : i32
    %c0_i32_0 = arith.constant 0 : i32
    return %arg0, %c0_i32 : i32, i32
  }
  func.func @transform_1(%arg0: i32, %arg1: memref<1xi32, #tpu.memory_space<smem>>) -> (i32, i32) {
    %c0_i32 = arith.constant 0 : i32
    %c0_i32_0 = arith.constant 0 : i32
    return %arg0, %c0_i32 : i32, i32
  }
  func.func @transform_2(%arg0: i32, %arg1: memref<1xi32, #tpu.memory_space<smem>>) -> (i32, i32, i32) {
    %0 = arith.index_cast %arg0 : i32 to index
    %1 = memref.load %arg1[%0] : memref<1xi32, #tpu.memory_space<smem>>
    %c0_i32 = arith.constant 0 : i32
    %c0_i32_0 = arith.constant 0 : i32
    %c0_i32_1 = arith.constant 0 : i32
    return %1, %c0_i32, %c0_i32_0 : i32, i32, i32
  }
  func.func @transform_3(%arg0: i32, %arg1: memref<1xi32, #tpu.memory_space<smem>>) -> (i32, i32, i32) {
    %0 = arith.index_cast %arg0 : i32 to index
    %1 = memref.load %arg1[%0] : memref<1xi32, #tpu.memory_space<smem>>
    %c0_i32 = arith.constant 0 : i32
    %c0_i32_0 = arith.constant 0 : i32
    %c0_i32_1 = arith.constant 0 : i32
    return %1, %c0_i32, %c0_i32_0 : i32, i32, i32
  }
  func.func @transform_4(%arg0: i32, %arg1: memref<1xi32, #tpu.memory_space<smem>>) -> (i32, i32) {
    %c0_i32 = arith.constant 0 : i32
    %c0_i32_0 = arith.constant 0 : i32
    %c0_i32_1 = arith.constant 0 : i32
    return %c0_i32, %c0_i32_0 : i32, i32
  }
  func.func @transform_5(%arg0: i32, %arg1: memref<1xi32, #tpu.memory_space<smem>>) -> (i32, i32) {
    %c0_i32 = arith.constant 0 : i32
    %c0_i32_0 = arith.constant 0 : i32
    %c0_i32_1 = arith.constant 0 : i32
    return %c0_i32, %c0_i32_0 : i32, i32
  }
  func.func @transform_6(%arg0: i32, %arg1: memref<1xi32, #tpu.memory_space<smem>>) -> (i32, i32) {
    %c0_i32 = arith.constant 0 : i32
    %c0_i32_0 = arith.constant 0 : i32
    %c0_i32_1 = arith.constant 0 : i32
    return %c0_i32, %c0_i32_0 : i32, i32
  }
  func.func @transform_7(%arg0: i32, %arg1: memref<1xi32, #tpu.memory_space<smem>>) -> (i32, i32) {
    %c0_i32 = arith.constant 0 : i32
    %c0_i32_0 = arith.constant 0 : i32
    %c0_i32_1 = arith.constant 0 : i32
    return %c0_i32, %c0_i32_0 : i32, i32
  }
  func.func @transform_8(%arg0: i32, %arg1: memref<1xi32, #tpu.memory_space<smem>>) -> (i32, i32) {
    %c0_i32 = arith.constant 0 : i32
    %c0_i32_0 = arith.constant 0 : i32
    return %arg0, %c0_i32 : i32, i32
  }
}

</mosaic_0001>

<llo_original>
// kernel: forward.3
$region0: #{forward.3}
  #allocation0 [shape = 'u32[]', space=smem, size = 0x4, offset = 0x4, fixed_abs, tag = 'smem constant byte address 0x4 - core index']
  #allocation1 [shape = 'u32[72,128]{1,0:T(1,128)}', space=vmem, size = 0x9000, scoped, tag = 'internal scratch']
  #allocation2 [shape = 's32[1]{0}', space=sflag, size = 0x4, scoped, tag = 'scoped memory for forward.3']
  #allocation3 [shape = 's32[1]{0:T(128)S(6)}', space=smem, size = 0x200, scoped, tag = 'prefetched SMEM operand 0']
  %s0 = inlined_call_operand.<no memory space> [shape: s32[1], index: 0, kind: input, shape index: {}]
  %s1 = inlined_call_operand.vmem [shape: bf16[64,256], index: 1, kind: input, shape index: {}]
  %s2 = inlined_call_operand.vmem [shape: f32[64,1], index: 2, kind: input, shape index: {}]
  %s3 = inlined_call_operand.vmem [shape: bf16[1,256,256], index: 3, kind: input, shape index: {}]
  %s4 = inlined_call_operand.vmem [shape: f32[1,1,256], index: 4, kind: input, shape index: {}]
  %s5 = inlined_call_operand.vmem [shape: bf16[256,128], index: 5, kind: input, shape index: {}]
  %s6 = inlined_call_operand.vmem [shape: f32[1,128], index: 6, kind: input, shape index: {}]
  %s7 = inlined_call_operand.vmem [shape: bf16[128,64], index: 7, kind: input, shape index: {}]
  %s8 = inlined_call_operand.vmem [shape: f32[1,64], index: 8, kind: input, shape index: {}]
  %s9 = inlined_call_operand.vmem [shape: f32[8,64], index: 9, kind: output, shape index: {}]
  %s10 = sld [smem:[#allocation0]]
  $region42: #{forward.3} parent=0
    _
  %s12 = ssub.s32 1, %s10
  %s13 = scalar_select 0, %s12, %s10
  %14 = sst [smem:[#allocation3]] %s0
  // Predicated region
  $region2: #{forward.3} parent=0 // pred_check
    _
  $region3: #{forward.3} parent=0 // pred_check_branch
    %16 = sbr.rel (0) target = $region5
  $region4: #{forward.3} parent=0 // pred_region
    _
  $region5: #{forward.3} parent=0 // pred_fallthru
    _
  // Predicated region
  $region6: #{forward.3} parent=0 // pred_check
    _
  $region7: #{forward.3} parent=0 // pred_check_branch
    %18 = sbr.rel (0) target = $region9
  $region8: #{forward.3} parent=0 // pred_region
    _
  $region9: #{forward.3} parent=0 // pred_fallthru
    _
  // Predicated region
  $region10: #{forward.3} parent=0 // pred_check
    _
  $region11: #{forward.3} parent=0 // pred_check_branch
    %20 = sbr.rel (0) target = $region13
  $region12: #{forward.3} parent=0 // pred_region
    %s21 = sld [smem:[#allocation3]]
    %p22 = scmp.lt.s32.totalorder %s21, 0
    %s23 = scalar_select %p22, %s21, 0
    %s24 = smul.addr %s23, 64
    %s25 = smul.addr %s24, 4
    %s26 = scalar_lea.vmem %s3, %s25
    %s27 = sld [smem:[#allocation3]]
  $region13: #{forward.3} parent=0 // pred_fallthru
    _
  // Predicated region
  $region14: #{forward.3} parent=0 // pred_check
    _
  $region15: #{forward.3} parent=0 // pred_check_branch
    %29 = sbr.rel (0) target = $region17
  $region16: #{forward.3} parent=0 // pred_region
    %s30 = sld [smem:[#allocation3]]
    %p31 = scmp.lt.s32.totalorder %s30, 0
    %s32 = scalar_select %p31, %s30, 0
    %s33 = smul.addr %s32, 2
    %s34 = scalar_lea.vmem %s4, %s33
    %s35 = sld [smem:[#allocation3]]
  $region17: #{forward.3} parent=0 // pred_fallthru
    _
  // Predicated region
  $region18: #{forward.3} parent=0 // pred_check
    _
  $region19: #{forward.3} parent=0 // pred_check_branch
    %37 = sbr.rel (0) target = $region21
  $region20: #{forward.3} parent=0 // pred_region
    _
  $region21: #{forward.3} parent=0 // pred_fallthru
    _
  // Predicated region
  $region22: #{forward.3} parent=0 // pred_check
    _
  $region23: #{forward.3} parent=0 // pred_check_branch
    %39 = sbr.rel (0) target = $region25
  $region24: #{forward.3} parent=0 // pred_region
    _
  $region25: #{forward.3} parent=0 // pred_fallthru
    _
  // Predicated region
  $region26: #{forward.3} parent=0 // pred_check
    _
  $region27: #{forward.3} parent=0 // pred_check_branch
    %41 = sbr.rel (0) target = $region29
  $region28: #{forward.3} parent=0 // pred_region
    _
  $region29: #{forward.3} parent=0 // pred_fallthru
    _
  // Predicated region
  $region30: #{forward.3} parent=0 // pred_check
    _
  $region31: #{forward.3} parent=0 // pred_check_branch
    %43 = sbr.rel (0) target = $region33
  $region32: #{forward.3} parent=0 // pred_region
    _
  $region33: #{forward.3} parent=0 // pred_fallthru
    _
  %s44 = sld [smem:[#allocation3]]
  %p45 = scmp.lt.s32.totalorder %s44, 0
  %s46 = scalar_select %p45, %s44, 0
  %s47 = smul.addr %s46, 64
  %s48 = smul.addr %s47, 4
  %s49 = scalar_lea.vmem %s3, %s48
  %s50 = sld [smem:[#allocation3]]
  %p51 = scmp.lt.s32.totalorder %s50, 0
  %s52 = scalar_select %p51, %s50, 0
  %s53 = smul.addr %s52, 2
  %s54 = scalar_lea.vmem %s4, %s53
  %s55 = sld [smem:[#allocation3]]
  %p56 = scmp.lt.s32.totalorder %s55, 0
  %s57 = scalar_select %p56, %s55, 0
  %s58 = smul.addr %s57, 64
  %s59 = smul.addr %s58, 4
  %s60 = scalar_lea.vmem %s3, %s59
  %s61 = sld [smem:[#allocation3]]
  %s62 = sld [smem:[#allocation3]]
  %p63 = scmp.lt.s32.totalorder %s62, 0
  %s64 = scalar_select %p63, %s62, 0
  %s65 = smul.addr %s64, 2
  %s66 = scalar_lea.vmem %s4, %s65
  %s67 = sld [smem:[#allocation3]]
  %v68 = vld [vmem:[%s1] sm:$0xff]
  %v69 = vld [vmem:[%s1 + $0x8] sm:$0xff]
  %v70 = vld [vmem:[%s1 + $0x10] sm:$0xff]
  %v71 = vld [vmem:[%s1 + $0x18] sm:$0xff]
  %v72 = vld [vmem:[%s1 + $0x20] sm:$0xff]
  %v73 = vld [vmem:[%s1 + $0x28] sm:$0xff]
  %v74 = vld [vmem:[%s1 + $0x30] sm:$0xff]
  %v75 = vld [vmem:[%s1 + $0x38] sm:$0xff]
  %v76 = vld [vmem:[%s60] sm:$0xff]
  %v77 = vld [vmem:[%s60 + $0x8] sm:$0xff]
  %v78 = vld [vmem:[%s60 + $0x10] sm:$0xff]
  %v79 = vld [vmem:[%s60 + $0x18] sm:$0xff]
  %v80 = vld [vmem:[%s60 + $0x20] sm:$0xff]
  %v81 = vld [vmem:[%s60 + $0x28] sm:$0xff]
  %v82 = vld [vmem:[%s60 + $0x30] sm:$0xff]
  %v83 = vld [vmem:[%s60 + $0x38] sm:$0xff]
  %v84 = vld [vmem:[%s60 + $0x40] sm:$0xff]
  %v85 = vld [vmem:[%s60 + $0x48] sm:$0xff]
  %v86 = vld [vmem:[%s60 + $0x50] sm:$0xff]
  %v87 = vld [vmem:[%s60 + $0x58] sm:$0xff]
  %v88 = vld [vmem:[%s60 + $0x60] sm:$0xff]
  %v89 = vld [vmem:[%s60 + $0x68] sm:$0xff]
  %v90 = vld [vmem:[%s60 + $0x70] sm:$0xff]
  %v91 = vld [vmem:[%s60 + $0x78] sm:$0xff]
  %v92 = vld [vmem:[%s60 + $0x80] sm:$0xff]
  %v93 = vld [vmem:[%s60 + $0x88] sm:$0xff]
  %v94 = vld [vmem:[%s60 + $0x90] sm:$0xff]
  %v95 = vld [vmem:[%s60 + $0x98] sm:$0xff]
  %v96 = vld [vmem:[%s60 + $0xa0] sm:$0xff]
  %v97 = vld [vmem:[%s60 + $0xa8] sm:$0xff]
  %v98 = vld [vmem:[%s60 + $0xb0] sm:$0xff]
  %v99 = vld [vmem:[%s60 + $0xb8] sm:$0xff]
  %v100 = vld [vmem:[%s60 + $0xc0] sm:$0xff]
  %v101 = vld [vmem:[%s60 + $0xc8] sm:$0xff]
  %v102 = vld [vmem:[%s60 + $0xd0] sm:$0xff]
  %v103 = vld [vmem:[%s60 + $0xd8] sm:$0xff]
  %v104 = vld [vmem:[%s60 + $0xe0] sm:$0xff]
  %v105 = vld [vmem:[%s60 + $0xe8] sm:$0xff]
  %v106 = vld [vmem:[%s60 + $0xf0] sm:$0xff]
  %v107 = vld [vmem:[%s60 + $0xf8] sm:$0xff]
  %v108 = vld [vmem:[%s66] sm:$0x3]
  %v110 = vperm.slane %v108, 0
  %v111 = vperm.slane %v108, 1
  %v122 = vunpack.c.l.b16 %v68
  %v123 = vunpack.c.h.b16 %v68
  %v124 = vunpack.c.l.b16 %v69
  %v125 = vunpack.c.h.b16 %v69
  %v126 = vunpack.c.l.b16 %v70
  %v127 = vunpack.c.h.b16 %v70
  %v128 = vunpack.c.l.b16 %v71
  %v129 = vunpack.c.h.b16 %v71
  %v130 = vunpack.c.l.b16 %v72
  %v131 = vunpack.c.h.b16 %v72
  %v132 = vunpack.c.l.b16 %v73
  %v133 = vunpack.c.h.b16 %v73
  %v134 = vunpack.c.l.b16 %v74
  %v135 = vunpack.c.h.b16 %v74
  %v136 = vunpack.c.l.b16 %v75
  %v137 = vunpack.c.h.b16 %v75
  %v138 = vpack.c.b16 %v124, %v122
  %v139 = vpack.c.b16 %v125, %v123
  %v140 = vpack.c.b16 %v128, %v126
  %v141 = vpack.c.b16 %v129, %v127
  %v142 = vpack.c.b16 %v132, %v130
  %v143 = vpack.c.b16 %v133, %v131
  %v144 = vpack.c.b16 %v136, %v134
  %v145 = vpack.c.b16 %v137, %v135
  %v186 = vunpack.c.l.b16 %v76
  %v187 = vunpack.c.h.b16 %v76
  %v188 = vunpack.c.l.b16 %v77
  %v189 = vunpack.c.h.b16 %v77
  %v190 = vunpack.c.l.b16 %v78
  %v191 = vunpack.c.h.b16 %v78
  %v192 = vunpack.c.l.b16 %v79
  %v193 = vunpack.c.h.b16 %v79
  %v194 = vunpack.c.l.b16 %v80
  %v195 = vunpack.c.h.b16 %v80
  %v196 = vunpack.c.l.b16 %v81
  %v197 = vunpack.c.h.b16 %v81
  %v198 = vunpack.c.l.b16 %v82
  %v199 = vunpack.c.h.b16 %v82
  %v200 = vunpack.c.l.b16 %v83
  %v201 = vunpack.c.h.b16 %v83
  %v202 = vunpack.c.l.b16 %v84
  %v203 = vunpack.c.h.b16 %v84
  %v204 = vunpack.c.l.b16 %v85
  %v205 = vunpack.c.h.b16 %v85
  %v206 = vunpack.c.l.b16 %v86
  %v207 = vunpack.c.h.b16 %v86
  %v208 = vunpack.c.l.b16 %v87
  %v209 = vunpack.c.h.b16 %v87
  %v210 = vunpack.c.l.b16 %v88
  %v211 = vunpack.c.h.b16 %v88
  %v212 = vunpack.c.l.b16 %v89
  %v213 = vunpack.c.h.b16 %v89
  %v214 = vunpack.c.l.b16 %v90
  %v215 = vunpack.c.h.b16 %v90
  %v216 = vunpack.c.l.b16 %v91
  %v217 = vunpack.c.h.b16 %v91
  %v218 = vunpack.c.l.b16 %v92
  %v219 = vunpack.c.h.b16 %v92
  %v220 = vunpack.c.l.b16 %v93
  %v221 = vunpack.c.h.b16 %v93
  %v222 = vunpack.c.l.b16 %v94
  %v223 = vunpack.c.h.b16 %v94
  %v224 = vunpack.c.l.b16 %v95
  %v225 = vunpack.c.h.b16 %v95
  %v226 = vunpack.c.l.b16 %v96
  %v227 = vunpack.c.h.b16 %v96
  %v228 = vunpack.c.l.b16 %v97
  %v229 = vunpack.c.h.b16 %v97
  %v230 = vunpack.c.l.b16 %v98
  %v231 = vunpack.c.h.b16 %v98
  %v232 = vunpack.c.l.b16 %v99
  %v233 = vunpack.c.h.b16 %v99
  %v234 = vunpack.c.l.b16 %v100
  %v235 = vunpack.c.h.b16 %v100
  %v236 = vunpack.c.l.b16 %v101
  %v237 = vunpack.c.h.b16 %v101
  %v238 = vunpack.c.l.b16 %v102
  %v239 = vunpack.c.h.b16 %v102
  %v240 = vunpack.c.l.b16 %v103
  %v241 = vunpack.c.h.b16 %v103
  %v242 = vunpack.c.l.b16 %v104
  %v243 = vunpack.c.h.b16 %v104
  %v244 = vunpack.c.l.b16 %v105
  %v245 = vunpack.c.h.b16 %v105
  %v246 = vunpack.c.l.b16 %v106
  %v247 = vunpack.c.h.b16 %v106
  %v248 = vunpack.c.l.b16 %v107
  %v249 = vunpack.c.h.b16 %v107
  %v250 = vpack.c.b16 %v188, %v186
  %v251 = vpack.c.b16 %v189, %v187
  %v252 = vpack.c.b16 %v192, %v190
  %v253 = vpack.c.b16 %v193, %v191
  %v254 = vpack.c.b16 %v196, %v194
  %v255 = vpack.c.b16 %v197, %v195
  %v256 = vpack.c.b16 %v200, %v198
  %v257 = vpack.c.b16 %v201, %v199
  %v258 = vpack.c.b16 %v204, %v202
  %v259 = vpack.c.b16 %v205, %v203
  %v260 = vpack.c.b16 %v208, %v206
  %v261 = vpack.c.b16 %v209, %v207
  %v262 = vpack.c.b16 %v212, %v210
  %v263 = vpack.c.b16 %v213, %v211
  %v264 = vpack.c.b16 %v216, %v214
  %v265 = vpack.c.b16 %v217, %v215
  %v266 = vpack.c.b16 %v220, %v218
  %v267 = vpack.c.b16 %v221, %v219
  %v268 = vpack.c.b16 %v224, %v222
  %v269 = vpack.c.b16 %v225, %v223
  %v270 = vpack.c.b16 %v228, %v226
  %v271 = vpack.c.b16 %v229, %v227
  %v272 = vpack.c.b16 %v232, %v230
  %v273 = vpack.c.b16 %v233, %v231
  %v274 = vpack.c.b16 %v236, %v234
  %v275 = vpack.c.b16 %v237, %v235
  %v276 = vpack.c.b16 %v240, %v238
  %v277 = vpack.c.b16 %v241, %v239
  %v278 = vpack.c.b16 %v244, %v242
  %v279 = vpack.c.b16 %v245, %v243
  %v280 = vpack.c.b16 %v248, %v246
  %v281 = vpack.c.b16 %v249, %v247
  %314 = vmatpush.bf16.msra.mxu0 %v264
  %315 = vmatpush.bf16.msra.mxu0 %v262
  %316 = vmatpush.bf16.msra.mxu0 %v260
  %317 = vmatpush.bf16.msra.mxu0 %v258
  %318 = vmatpush.bf16.msra.mxu0 %v256
  %319 = vmatpush.bf16.msra.mxu0 %v254
  %320 = vmatpush.bf16.msra.mxu0 %v252
  %321 = vmatpush.bf16.msra.mxu0 %v250
  %322 = vmatmul.bf16.gmra.mxu0 %v138
  %v323 = vpop.f32.mrf.mxu0
  %v324 = vadd.f32 %v110, %v323
  %v325 = vpop.f32.mrf.mxu0
  %v326 = vadd.f32 %v110, %v325
  %327 = vmatmul.bf16.gmra.mxu0 %v140
  %v328 = vpop.f32.mrf.mxu0
  %v329 = vadd.f32 %v110, %v328
  %v330 = vpop.f32.mrf.mxu0
  %v331 = vadd.f32 %v110, %v330
  %332 = vmatmul.bf16.gmra.mxu0 %v142
  %v333 = vpop.f32.mrf.mxu0
  %v334 = vadd.f32 %v110, %v333
  %v335 = vpop.f32.mrf.mxu0
  %v336 = vadd.f32 %v110, %v335
  %337 = vmatmul.bf16.gmra.mxu0 %v144
  %v338 = vpop.f32.mrf.mxu0
  %v339 = vadd.f32 %v110, %v338
  %v340 = vpop.f32.mrf.mxu0
  %v341 = vadd.f32 %v110, %v340
  %342 = vdwg.mxu0
  %343 = vmatpush.bf16.msra.mxu0 %v280
  %344 = vmatpush.bf16.msra.mxu0 %v278
  %345 = vmatpush.bf16.msra.mxu0 %v276
  %346 = vmatpush.bf16.msra.mxu0 %v274
  %347 = vmatpush.bf16.msra.mxu0 %v272
  %348 = vmatpush.bf16.msra.mxu0 %v270
  %349 = vmatpush.bf16.msra.mxu0 %v268
  %350 = vmatpush.bf16.msra.mxu0 %v266
  %351 = vmatmul.bf16.gmra.mxu0 %v139
  %v352 = vpop.f32.mrf.mxu0
  %v353 = vadd.f32 %v324, %v352
  %v354 = vpop.f32.mrf.mxu0
  %v355 = vadd.f32 %v326, %v354
  %356 = vmatmul.bf16.gmra.mxu0 %v141
  %v357 = vpop.f32.mrf.mxu0
  %v358 = vadd.f32 %v329, %v357
  %v359 = vpop.f32.mrf.mxu0
  %v360 = vadd.f32 %v331, %v359
  %361 = vmatmul.bf16.gmra.mxu0 %v143
  %v362 = vpop.f32.mrf.mxu0
  %v363 = vadd.f32 %v334, %v362
  %v364 = vpop.f32.mrf.mxu0
  %v365 = vadd.f32 %v336, %v364
  %366 = vmatmul.bf16.gmra.mxu0 %v145
  %v367 = vpop.f32.mrf.mxu0
  %v368 = vadd.f32 %v339, %v367
  %v369 = vpop.f32.mrf.mxu0
  %v370 = vadd.f32 %v341, %v369
  %371 = vdwg.mxu0
  %372 = vmatpush.bf16.msra.mxu0 %v265
  %373 = vmatpush.bf16.msra.mxu0 %v263
  %374 = vmatpush.bf16.msra.mxu0 %v261
  %375 = vmatpush.bf16.msra.mxu0 %v259
  %376 = vmatpush.bf16.msra.mxu0 %v257
  %377 = vmatpush.bf16.msra.mxu0 %v255
  %378 = vmatpush.bf16.msra.mxu0 %v253
  %379 = vmatpush.bf16.msra.mxu0 %v251
  %380 = vmatmul.bf16.gmra.mxu0 %v138
  %v381 = vpop.f32.mrf.mxu0
  %v382 = vadd.f32 %v111, %v381
  %v383 = vpop.f32.mrf.mxu0
  %v384 = vadd.f32 %v111, %v383
  %385 = vmatmul.bf16.gmra.mxu0 %v140
  %v386 = vpop.f32.mrf.mxu0
  %v387 = vadd.f32 %v111, %v386
  %v388 = vpop.f32.mrf.mxu0
  %v389 = vadd.f32 %v111, %v388
  %390 = vmatmul.bf16.gmra.mxu0 %v142
  %v391 = vpop.f32.mrf.mxu0
  %v392 = vadd.f32 %v111, %v391
  %v393 = vpop.f32.mrf.mxu0
  %v394 = vadd.f32 %v111, %v393
  %395 = vmatmul.bf16.gmra.mxu0 %v144
  %v396 = vpop.f32.mrf.mxu0
  %v397 = vadd.f32 %v111, %v396
  %v398 = vpop.f32.mrf.mxu0
  %v399 = vadd.f32 %v111, %v398
  %400 = vdwg.mxu0
  %401 = vmatpush.bf16.msra.mxu0 %v281
  %402 = vmatpush.bf16.msra.mxu0 %v279
  %403 = vmatpush.bf16.msra.mxu0 %v277
  %404 = vmatpush.bf16.msra.mxu0 %v275
  %405 = vmatpush.bf16.msra.mxu0 %v273
  %406 = vmatpush.bf16.msra.mxu0 %v271
  %407 = vmatpush.bf16.msra.mxu0 %v269
  %408 = vmatpush.bf16.msra.mxu0 %v267
  %409 = vmatmul.bf16.gmra.mxu0 %v139
  %v410 = vpop.f32.mrf.mxu0
  %v411 = vadd.f32 %v382, %v410
  %v412 = vpop.f32.mrf.mxu0
  %v413 = vadd.f32 %v384, %v412
  %414 = vmatmul.bf16.gmra.mxu0 %v141
  %v415 = vpop.f32.mrf.mxu0
  %v416 = vadd.f32 %v387, %v415
  %v417 = vpop.f32.mrf.mxu0
  %v418 = vadd.f32 %v389, %v417
  %419 = vmatmul.bf16.gmra.mxu0 %v143
  %v420 = vpop.f32.mrf.mxu0
  %v421 = vadd.f32 %v392, %v420
  %v422 = vpop.f32.mrf.mxu0
  %v423 = vadd.f32 %v394, %v422
  %424 = vmatmul.bf16.gmra.mxu0 %v145
  %v425 = vpop.f32.mrf.mxu0
  %v426 = vadd.f32 %v397, %v425
  %v427 = vpop.f32.mrf.mxu0
  %v428 = vadd.f32 %v399, %v427
  %429 = vdwg.mxu0
  %v430 = vmul.f32 %v353, 0.5
  %v431 = vmul.f32 %v411, 0.5
  %v432 = vmul.f32 %v355, 0.5
  %v433 = vmul.f32 %v413, 0.5
  %v434 = vmul.f32 %v358, 0.5
  %v435 = vmul.f32 %v416, 0.5
  %v436 = vmul.f32 %v360, 0.5
  %v437 = vmul.f32 %v418, 0.5
  %v438 = vmul.f32 %v363, 0.5
  %v439 = vmul.f32 %v421, 0.5
  %v440 = vmul.f32 %v365, 0.5
  %v441 = vmul.f32 %v423, 0.5
  %v442 = vmul.f32 %v368, 0.5
  %v443 = vmul.f32 %v426, 0.5
  %v444 = vmul.f32 %v370, 0.5
  %v445 = vmul.f32 %v428, 0.5
  %v446 = vmul.f32 %v353, %v353
  %v447 = vmul.f32 %v411, %v411
  %v448 = vmul.f32 %v355, %v355
  %v449 = vmul.f32 %v413, %v413
  %v450 = vmul.f32 %v358, %v358
  %v451 = vmul.f32 %v416, %v416
  %v452 = vmul.f32 %v360, %v360
  %v453 = vmul.f32 %v418, %v418
  %v454 = vmul.f32 %v363, %v363
  %v455 = vmul.f32 %v421, %v421
  %v456 = vmul.f32 %v365, %v365
  %v457 = vmul.f32 %v423, %v423
  %v458 = vmul.f32 %v368, %v368
  %v459 = vmul.f32 %v426, %v426
  %v460 = vmul.f32 %v370, %v370
  %v461 = vmul.f32 %v428, %v428
  %v462 = vmul.f32 %v446, %v353
  %v463 = vmul.f32 %v447, %v411
  %v464 = vmul.f32 %v448, %v355
  %v465 = vmul.f32 %v449, %v413
  %v466 = vmul.f32 %v450, %v358
  %v467 = vmul.f32 %v451, %v416
  %v468 = vmul.f32 %v452, %v360
  %v469 = vmul.f32 %v453, %v418
  %v470 = vmul.f32 %v454, %v363
  %v471 = vmul.f32 %v455, %v421
  %v472 = vmul.f32 %v456, %v365
  %v473 = vmul.f32 %v457, %v423
  %v474 = vmul.f32 %v458, %v368
  %v475 = vmul.f32 %v459, %v426
  %v476 = vmul.f32 %v460, %v370
  %v477 = vmul.f32 %v461, %v428
  %v478 = vmul.f32 %v462, 0.044715
  %v479 = vmul.f32 %v463, 0.044715
  %v480 = vmul.f32 %v464, 0.044715
  %v481 = vmul.f32 %v465, 0.044715
  %v482 = vmul.f32 %v466, 0.044715
  %v483 = vmul.f32 %v467, 0.044715
  %v484 = vmul.f32 %v468, 0.044715
  %v485 = vmul.f32 %v469, 0.044715
  %v486 = vmul.f32 %v470, 0.044715
  %v487 = vmul.f32 %v471, 0.044715
  %v488 = vmul.f32 %v472, 0.044715
  %v489 = vmul.f32 %v473, 0.044715
  %v490 = vmul.f32 %v474, 0.044715
  %v491 = vmul.f32 %v475, 0.044715
  %v492 = vmul.f32 %v476, 0.044715
  %v493 = vmul.f32 %v477, 0.044715
  %v494 = vadd.f32 %v353, %v478
  %v495 = vadd.f32 %v411, %v479
  %v496 = vadd.f32 %v355, %v480
  %v497 = vadd.f32 %v413, %v481
  %v498 = vadd.f32 %v358, %v482
  %v499 = vadd.f32 %v416, %v483
  %v500 = vadd.f32 %v360, %v484
  %v501 = vadd.f32 %v418, %v485
  %v502 = vadd.f32 %v363, %v486
  %v503 = vadd.f32 %v421, %v487
  %v504 = vadd.f32 %v365, %v488
  %v505 = vadd.f32 %v423, %v489
  %v506 = vadd.f32 %v368, %v490
  %v507 = vadd.f32 %v426, %v491
  %v508 = vadd.f32 %v370, %v492
  %v509 = vadd.f32 %v428, %v493
  %v510 = vmul.f32 %v494, 0.7978846
  %v511 = vmul.f32 %v495, 0.7978846
  %v512 = vmul.f32 %v496, 0.7978846
  %v513 = vmul.f32 %v497, 0.7978846
  %v514 = vmul.f32 %v498, 0.7978846
  %v515 = vmul.f32 %v499, 0.7978846
  %v516 = vmul.f32 %v500, 0.7978846
  %v517 = vmul.f32 %v501, 0.7978846
  %v518 = vmul.f32 %v502, 0.7978846
  %v519 = vmul.f32 %v503, 0.7978846
  %v520 = vmul.f32 %v504, 0.7978846
  %v521 = vmul.f32 %v505, 0.7978846
  %v522 = vmul.f32 %v506, 0.7978846
  %v523 = vmul.f32 %v507, 0.7978846
  %v524 = vmul.f32 %v508, 0.7978846
  %v525 = vmul.f32 %v509, 0.7978846
  %v526 = vtanh.pop %v510
  %v527 = vtanh.pop %v511
  %v528 = vtanh.pop %v512
  %v529 = vtanh.pop %v513
  %v530 = vtanh.pop %v514
  %v531 = vtanh.pop %v515
  %v532 = vtanh.pop %v516
  %v533 = vtanh.pop %v517
  %v534 = vtanh.pop %v518
  %v535 = vtanh.pop %v519
  %v536 = vtanh.pop %v520
  %v537 = vtanh.pop %v521
  %v538 = vtanh.pop %v522
  %v539 = vtanh.pop %v523
  %v540 = vtanh.pop %v524
  %v541 = vtanh.pop %v525
  %v542 = vadd.f32 %v526, 1.0
  %v543 = vadd.f32 %v527, 1.0
  %v544 = vadd.f32 %v528, 1.0
  %v545 = vadd.f32 %v529, 1.0
  %v546 = vadd.f32 %v530, 1.0
  %v547 = vadd.f32 %v531, 1.0
  %v548 = vadd.f32 %v532, 1.0
  %v549 = vadd.f32 %v533, 1.0
  %v550 = vadd.f32 %v534, 1.0
  %v551 = vadd.f32 %v535, 1.0
  %v552 = vadd.f32 %v536, 1.0
  %v553 = vadd.f32 %v537, 1.0
  %v554 = vadd.f32 %v538, 1.0
  %v555 = vadd.f32 %v539, 1.0
  %v556 = vadd.f32 %v540, 1.0
  %v557 = vadd.f32 %v541, 1.0
  %v558 = vmul.f32 %v430, %v542
  %v559 = vmul.f32 %v431, %v543
  %v560 = vmul.f32 %v432, %v544
  %v561 = vmul.f32 %v433, %v545
  %v562 = vmul.f32 %v434, %v546
  %v563 = vmul.f32 %v435, %v547
  %v564 = vmul.f32 %v436, %v548
  %v565 = vmul.f32 %v437, %v549
  %v566 = vmul.f32 %v438, %v550
  %v567 = vmul.f32 %v439, %v551
  %v568 = vmul.f32 %v440, %v552
  %v569 = vmul.f32 %v441, %v553
  %v570 = vmul.f32 %v442, %v554
  %v571 = vmul.f32 %v443, %v555
  %v572 = vmul.f32 %v444, %v556
  %v573 = vmul.f32 %v445, %v557
  %v574 = vpack.c.bf16 %v560, %v558
  %v575 = vpack.c.bf16 %v561, %v559
  %v576 = vpack.c.bf16 %v564, %v562
  %v577 = vpack.c.bf16 %v565, %v563
  %v578 = vpack.c.bf16 %v568, %v566
  %v579 = vpack.c.bf16 %v569, %v567
  %v580 = vpack.c.bf16 %v572, %v570
  %v581 = vpack.c.bf16 %v573, %v571
  %v582 = vld [vmem:[%s5] sm:$0xf]
  %v583 = vld [vmem:[%s5 + $0x4] sm:$0xf]
  %v584 = vld [vmem:[%s5 + $0x8] sm:$0xf]
  %v585 = vld [vmem:[%s5 + $0xc] sm:$0xf]
  %v586 = vld [vmem:[%s5 + $0x10] sm:$0xf]
  %v587 = vld [vmem:[%s5 + $0x14] sm:$0xf]
  %v588 = vld [vmem:[%s5 + $0x18] sm:$0xf]
  %v589 = vld [vmem:[%s5 + $0x1c] sm:$0xf]
  %v590 = vld [vmem:[%s5 + $0x20] sm:$0xf]
  %v591 = vld [vmem:[%s5 + $0x24] sm:$0xf]
  %v592 = vld [vmem:[%s5 + $0x28] sm:$0xf]
  %v593 = vld [vmem:[%s5 + $0x2c] sm:$0xf]
  %v594 = vld [vmem:[%s5 + $0x30] sm:$0xf]
  %v595 = vld [vmem:[%s5 + $0x34] sm:$0xf]
  %v596 = vld [vmem:[%s5 + $0x38] sm:$0xf]
  %v597 = vld [vmem:[%s5 + $0x3c] sm:$0xf]
  %v598 = vld [vmem:[%s5 + $0x40] sm:$0xf]
  %v599 = vld [vmem:[%s5 + $0x44] sm:$0xf]
  %v600 = vld [vmem:[%s5 + $0x48] sm:$0xf]
  %v601 = vld [vmem:[%s5 + $0x4c] sm:$0xf]
  %v602 = vld [vmem:[%s5 + $0x50] sm:$0xf]
  %v603 = vld [vmem:[%s5 + $0x54] sm:$0xf]
  %v604 = vld [vmem:[%s5 + $0x58] sm:$0xf]
  %v605 = vld [vmem:[%s5 + $0x5c] sm:$0xf]
  %v606 = vld [vmem:[%s5 + $0x60] sm:$0xf]
  %v607 = vld [vmem:[%s5 + $0x64] sm:$0xf]
  %v608 = vld [vmem:[%s5 + $0x68] sm:$0xf]
  %v609 = vld [vmem:[%s5 + $0x6c] sm:$0xf]
  %v610 = vld [vmem:[%s5 + $0x70] sm:$0xf]
  %v611 = vld [vmem:[%s5 + $0x74] sm:$0xf]
  %v612 = vld [vmem:[%s5 + $0x78] sm:$0xf]
  %v613 = vld [vmem:[%s5 + $0x7c] sm:$0xf]
  %v614 = vld [vmem:[%s6] sm:$0x1]
  %v616 = vperm.slane %v614, 0
  %v650 = vunpack.c.l.b16 %v582
  %v651 = vunpack.c.l.b16 %v583
  %v652 = vunpack.c.l.b16 %v584
  %v653 = vunpack.c.l.b16 %v585
  %v654 = vunpack.c.l.b16 %v586
  %v655 = vunpack.c.l.b16 %v587
  %v656 = vunpack.c.l.b16 %v588
  %v657 = vunpack.c.l.b16 %v589
  %v658 = vunpack.c.l.b16 %v590
  %v659 = vunpack.c.l.b16 %v591
  %v660 = vunpack.c.l.b16 %v592
  %v661 = vunpack.c.l.b16 %v593
  %v662 = vunpack.c.l.b16 %v594
  %v663 = vunpack.c.l.b16 %v595
  %v664 = vunpack.c.l.b16 %v596
  %v665 = vunpack.c.l.b16 %v597
  %v666 = vunpack.c.l.b16 %v598
  %v667 = vunpack.c.l.b16 %v599
  %v668 = vunpack.c.l.b16 %v600
  %v669 = vunpack.c.l.b16 %v601
  %v670 = vunpack.c.l.b16 %v602
  %v671 = vunpack.c.l.b16 %v603
  %v672 = vunpack.c.l.b16 %v604
  %v673 = vunpack.c.l.b16 %v605
  %v674 = vunpack.c.l.b16 %v606
  %v675 = vunpack.c.l.b16 %v607
  %v676 = vunpack.c.l.b16 %v608
  %v677 = vunpack.c.l.b16 %v609
  %v678 = vunpack.c.l.b16 %v610
  %v679 = vunpack.c.l.b16 %v611
  %v680 = vunpack.c.l.b16 %v612
  %v681 = vunpack.c.l.b16 %v613
  %v682 = vpack.c.b16 %v651, %v650
  %v683 = vpack.c.b16 %v653, %v652
  %v684 = vpack.c.b16 %v655, %v654
  %v685 = vpack.c.b16 %v657, %v656
  %v686 = vpack.c.b16 %v659, %v658
  %v687 = vpack.c.b16 %v661, %v660
  %v688 = vpack.c.b16 %v663, %v662
  %v689 = vpack.c.b16 %v665, %v664
  %v690 = vpack.c.b16 %v667, %v666
  %v691 = vpack.c.b16 %v669, %v668
  %v692 = vpack.c.b16 %v671, %v670
  %v693 = vpack.c.b16 %v673, %v672
  %v694 = vpack.c.b16 %v675, %v674
  %v695 = vpack.c.b16 %v677, %v676
  %v696 = vpack.c.b16 %v679, %v678
  %v697 = vpack.c.b16 %v681, %v680
  %714 = vmatpush.bf16.msra.mxu0 %v689
  %715 = vmatpush.bf16.msra.mxu0 %v688
  %716 = vmatpush.bf16.msra.mxu0 %v687
  %717 = vmatpush.bf16.msra.mxu0 %v686
  %718 = vmatpush.bf16.msra.mxu0 %v685
  %719 = vmatpush.bf16.msra.mxu0 %v684
  %720 = vmatpush.bf16.msra.mxu0 %v683
  %721 = vmatpush.bf16.msra.mxu0 %v682
  %722 = vmatmul.bf16.gmra.mxu0 %v574
  %v723 = vpop.f32.mrf.mxu0
  %v724 = vadd.f32 %v616, %v723
  %v725 = vpop.f32.mrf.mxu0
  %v726 = vadd.f32 %v616, %v725
  %727 = vmatmul.bf16.gmra.mxu0 %v576
  %v728 = vpop.f32.mrf.mxu0
  %v729 = vadd.f32 %v616, %v728
  %v730 = vpop.f32.mrf.mxu0
  %v731 = vadd.f32 %v616, %v730
  %732 = vmatmul.bf16.gmra.mxu0 %v578
  %v733 = vpop.f32.mrf.mxu0
  %v734 = vadd.f32 %v616, %v733
  %v735 = vpop.f32.mrf.mxu0
  %v736 = vadd.f32 %v616, %v735
  %737 = vmatmul.bf16.gmra.mxu0 %v580
  %v738 = vpop.f32.mrf.mxu0
  %v739 = vadd.f32 %v616, %v738
  %v740 = vpop.f32.mrf.mxu0
  %v741 = vadd.f32 %v616, %v740
  %742 = vdwg.mxu0
  %743 = vmatpush.bf16.msra.mxu0 %v697
  %744 = vmatpush.bf16.msra.mxu0 %v696
  %745 = vmatpush.bf16.msra.mxu0 %v695
  %746 = vmatpush.bf16.msra.mxu0 %v694
  %747 = vmatpush.bf16.msra.mxu0 %v693
  %748 = vmatpush.bf16.msra.mxu0 %v692
  %749 = vmatpush.bf16.msra.mxu0 %v691
  %750 = vmatpush.bf16.msra.mxu0 %v690
  %751 = vmatmul.bf16.gmra.mxu0 %v575
  %v752 = vpop.f32.mrf.mxu0
  %v753 = vadd.f32 %v724, %v752
  %v754 = vpop.f32.mrf.mxu0
  %v755 = vadd.f32 %v726, %v754
  %756 = vmatmul.bf16.gmra.mxu0 %v577
  %v757 = vpop.f32.mrf.mxu0
  %v758 = vadd.f32 %v729, %v757
  %v759 = vpop.f32.mrf.mxu0
  %v760 = vadd.f32 %v731, %v759
  %761 = vmatmul.bf16.gmra.mxu0 %v579
  %v762 = vpop.f32.mrf.mxu0
  %v763 = vadd.f32 %v734, %v762
  %v764 = vpop.f32.mrf.mxu0
  %v765 = vadd.f32 %v736, %v764
  %766 = vmatmul.bf16.gmra.mxu0 %v581
  %v767 = vpop.f32.mrf.mxu0
  %v768 = vadd.f32 %v739, %v767
  %v769 = vpop.f32.mrf.mxu0
  %v770 = vadd.f32 %v741, %v769
  %771 = vdwg.mxu0
  %v772 = vmul.f32 %v753, 0.5
  %v773 = vmul.f32 %v755, 0.5
  %v774 = vmul.f32 %v758, 0.5
  %v775 = vmul.f32 %v760, 0.5
  %v776 = vmul.f32 %v763, 0.5
  %v777 = vmul.f32 %v765, 0.5
  %v778 = vmul.f32 %v768, 0.5
  %v779 = vmul.f32 %v770, 0.5
  %v780 = vmul.f32 %v753, %v753
  %v781 = vmul.f32 %v755, %v755
  %v782 = vmul.f32 %v758, %v758
  %v783 = vmul.f32 %v760, %v760
  %v784 = vmul.f32 %v763, %v763
  %v785 = vmul.f32 %v765, %v765
  %v786 = vmul.f32 %v768, %v768
  %v787 = vmul.f32 %v770, %v770
  %v788 = vmul.f32 %v780, %v753
  %v789 = vmul.f32 %v781, %v755
  %v790 = vmul.f32 %v782, %v758
  %v791 = vmul.f32 %v783, %v760
  %v792 = vmul.f32 %v784, %v763
  %v793 = vmul.f32 %v785, %v765
  %v794 = vmul.f32 %v786, %v768
  %v795 = vmul.f32 %v787, %v770
  %v796 = vmul.f32 %v788, 0.044715
  %v797 = vmul.f32 %v789, 0.044715
  %v798 = vmul.f32 %v790, 0.044715
  %v799 = vmul.f32 %v791, 0.044715
  %v800 = vmul.f32 %v792, 0.044715
  %v801 = vmul.f32 %v793, 0.044715
  %v802 = vmul.f32 %v794, 0.044715
  %v803 = vmul.f32 %v795, 0.044715
  %v804 = vadd.f32 %v753, %v796
  %v805 = vadd.f32 %v755, %v797
  %v806 = vadd.f32 %v758, %v798
  %v807 = vadd.f32 %v760, %v799
  %v808 = vadd.f32 %v763, %v800
  %v809 = vadd.f32 %v765, %v801
  %v810 = vadd.f32 %v768, %v802
  %v811 = vadd.f32 %v770, %v803
  %v812 = vmul.f32 %v804, 0.7978846
  %v813 = vmul.f32 %v805, 0.7978846
  %v814 = vmul.f32 %v806, 0.7978846
  %v815 = vmul.f32 %v807, 0.7978846
  %v816 = vmul.f32 %v808, 0.7978846
  %v817 = vmul.f32 %v809, 0.7978846
  %v818 = vmul.f32 %v810, 0.7978846
  %v819 = vmul.f32 %v811, 0.7978846
  %v820 = vtanh.pop %v812
  %v821 = vtanh.pop %v813
  %v822 = vtanh.pop %v814
  %v823 = vtanh.pop %v815
  %v824 = vtanh.pop %v816
  %v825 = vtanh.pop %v817
  %v826 = vtanh.pop %v818
  %v827 = vtanh.pop %v819
  %v828 = vadd.f32 %v820, 1.0
  %v829 = vadd.f32 %v821, 1.0
  %v830 = vadd.f32 %v822, 1.0
  %v831 = vadd.f32 %v823, 1.0
  %v832 = vadd.f32 %v824, 1.0
  %v833 = vadd.f32 %v825, 1.0
  %v834 = vadd.f32 %v826, 1.0
  %v835 = vadd.f32 %v827, 1.0
  %v836 = vmul.f32 %v772, %v828
  %v837 = vmul.f32 %v773, %v829
  %v838 = vmul.f32 %v774, %v830
  %v839 = vmul.f32 %v775, %v831
  %v840 = vmul.f32 %v776, %v832
  %v841 = vmul.f32 %v777, %v833
  %v842 = vmul.f32 %v778, %v834
  %v843 = vmul.f32 %v779, %v835
  %v844 = vpack.c.bf16 %v837, %v836
  %v845 = vpack.c.bf16 %v839, %v838
  %v846 = vpack.c.bf16 %v841, %v840
  %v847 = vpack.c.bf16 %v843, %v842
  %v848 = vld [vmem:[%s7] sm:$0xf]
  %v849 = vld [vmem:[%s7 + $0x4] sm:$0xf]
  %v850 = vld [vmem:[%s7 + $0x8] sm:$0xf]
  %v851 = vld [vmem:[%s7 + $0xc] sm:$0xf]
  %v852 = vld [vmem:[%s7 + $0x10] sm:$0xf]
  %v853 = vld [vmem:[%s7 + $0x14] sm:$0xf]
  %v854 = vld [vmem:[%s7 + $0x18] sm:$0xf]
  %v855 = vld [vmem:[%s7 + $0x1c] sm:$0xf]
  %v856 = vld [vmem:[%s7 + $0x20] sm:$0xf]
  %v857 = vld [vmem:[%s7 + $0x24] sm:$0xf]
  %v858 = vld [vmem:[%s7 + $0x28] sm:$0xf]
  %v859 = vld [vmem:[%s7 + $0x2c] sm:$0xf]
  %v860 = vld [vmem:[%s7 + $0x30] sm:$0xf]
  %v861 = vld [vmem:[%s7 + $0x34] sm:$0xf]
  %v862 = vld [vmem:[%s7 + $0x38] sm:$0xf]
  %v863 = vld [vmem:[%s7 + $0x3c] sm:$0xf]
  %v864 = vld [vmem:[%s8] sm:$0x1]
  %v866 = vperm.slane %v864, 0
  %v884 = vunpack.c.l.b16 %v848
  %v885 = vunpack.c.l.b16 %v849
  %v886 = vunpack.c.l.b16 %v850
  %v887 = vunpack.c.l.b16 %v851
  %v888 = vunpack.c.l.b16 %v852
  %v889 = vunpack.c.l.b16 %v853
  %v890 = vunpack.c.l.b16 %v854
  %v891 = vunpack.c.l.b16 %v855
  %v892 = vunpack.c.l.b16 %v856
  %v893 = vunpack.c.l.b16 %v857
  %v894 = vunpack.c.l.b16 %v858
  %v895 = vunpack.c.l.b16 %v859
  %v896 = vunpack.c.l.b16 %v860
  %v897 = vunpack.c.l.b16 %v861
  %v898 = vunpack.c.l.b16 %v862
  %v899 = vunpack.c.l.b16 %v863
  %v900 = vpack.c.b16 %v885, %v884
  %v901 = vpack.c.b16 %v887, %v886
  %v902 = vpack.c.b16 %v889, %v888
  %v903 = vpack.c.b16 %v891, %v890
  %v904 = vpack.c.b16 %v893, %v892
  %v905 = vpack.c.b16 %v895, %v894
  %v906 = vpack.c.b16 %v897, %v896
  %v907 = vpack.c.b16 %v899, %v898
  %916 = vmatpush.bf16.msra.mxu0 %v907
  %917 = vmatpush.bf16.msra.mxu0 %v906
  %918 = vmatpush.bf16.msra.mxu0 %v905
  %919 = vmatpush.bf16.msra.mxu0 %v904
  %920 = vmatpush.bf16.msra.mxu0 %v903
  %921 = vmatpush.bf16.msra.mxu0 %v902
  %922 = vmatpush.bf16.msra.mxu0 %v901
  %923 = vmatpush.bf16.msra.mxu0 %v900
  %924 = vmatmul.bf16.gmra.mxu0 %v844
  %v925 = vpop.f32.mrf.mxu0
  %v926 = vadd.f32 %v866, %v925
  %v927 = vpop.f32.mrf.mxu0
  %v928 = vadd.f32 %v866, %v927
  %929 = vmatmul.bf16.gmra.mxu0 %v845
  %v930 = vpop.f32.mrf.mxu0
  %v931 = vadd.f32 %v866, %v930
  %v932 = vpop.f32.mrf.mxu0
  %v933 = vadd.f32 %v866, %v932
  %934 = vmatmul.bf16.gmra.mxu0 %v846
  %v935 = vpop.f32.mrf.mxu0
  %v936 = vadd.f32 %v866, %v935
  %v937 = vpop.f32.mrf.mxu0
  %v938 = vadd.f32 %v866, %v937
  %939 = vmatmul.bf16.gmra.mxu0 %v847
  %v940 = vpop.f32.mrf.mxu0
  %v941 = vadd.f32 %v866, %v940
  %v942 = vpop.f32.mrf.mxu0
  %v943 = vadd.f32 %v866, %v942
  %944 = vdwg.mxu0
  %v945 = vmul.f32 %v926, 0.5
  %v946 = vmul.f32 %v928, 0.5
  %v947 = vmul.f32 %v931, 0.5
  %v948 = vmul.f32 %v933, 0.5
  %v949 = vmul.f32 %v936, 0.5
  %v950 = vmul.f32 %v938, 0.5
  %v951 = vmul.f32 %v941, 0.5
  %v952 = vmul.f32 %v943, 0.5
  %v953 = vmul.f32 %v926, %v926
  %v954 = vmul.f32 %v928, %v928
  %v955 = vmul.f32 %v931, %v931
  %v956 = vmul.f32 %v933, %v933
  %v957 = vmul.f32 %v936, %v936
  %v958 = vmul.f32 %v938, %v938
  %v959 = vmul.f32 %v941, %v941
  %v960 = vmul.f32 %v943, %v943
  %v961 = vmul.f32 %v953, %v926
  %v962 = vmul.f32 %v954, %v928
  %v963 = vmul.f32 %v955, %v931
  %v964 = vmul.f32 %v956, %v933
  %v965 = vmul.f32 %v957, %v936
  %v966 = vmul.f32 %v958, %v938
  %v967 = vmul.f32 %v959, %v941
  %v968 = vmul.f32 %v960, %v943
  %v969 = vmul.f32 %v961, 0.044715
  %v970 = vmul.f32 %v962, 0.044715
  %v971 = vmul.f32 %v963, 0.044715
  %v972 = vmul.f32 %v964, 0.044715
  %v973 = vmul.f32 %v965, 0.044715
  %v974 = vmul.f32 %v966, 0.044715
  %v975 = vmul.f32 %v967, 0.044715
  %v976 = vmul.f32 %v968, 0.044715
  %v977 = vadd.f32 %v926, %v969
  %v978 = vadd.f32 %v928, %v970
  %v979 = vadd.f32 %v931, %v971
  %v980 = vadd.f32 %v933, %v972
  %v981 = vadd.f32 %v936, %v973
  %v982 = vadd.f32 %v938, %v974
  %v983 = vadd.f32 %v941, %v975
  %v984 = vadd.f32 %v943, %v976
  %v985 = vmul.f32 %v977, 0.7978846
  %v986 = vmul.f32 %v978, 0.7978846
  %v987 = vmul.f32 %v979, 0.7978846
  %v988 = vmul.f32 %v980, 0.7978846
  %v989 = vmul.f32 %v981, 0.7978846
  %v990 = vmul.f32 %v982, 0.7978846
  %v991 = vmul.f32 %v983, 0.7978846
  %v992 = vmul.f32 %v984, 0.7978846
  %v993 = vtanh.pop %v985
  %v994 = vtanh.pop %v986
  %v995 = vtanh.pop %v987
  %v996 = vtanh.pop %v988
  %v997 = vtanh.pop %v989
  %v998 = vtanh.pop %v990
  %v999 = vtanh.pop %v991
  %v1000 = vtanh.pop %v992
  %v1001 = vadd.f32 %v993, 1.0
  %v1002 = vadd.f32 %v994, 1.0
  %v1003 = vadd.f32 %v995, 1.0
  %v1004 = vadd.f32 %v996, 1.0
  %v1005 = vadd.f32 %v997, 1.0
  %v1006 = vadd.f32 %v998, 1.0
  %v1007 = vadd.f32 %v999, 1.0
  %v1008 = vadd.f32 %v1000, 1.0
  %v1009 = vmul.f32 %v945, %v1001
  %v1010 = vmul.f32 %v946, %v1002
  %v1011 = vmul.f32 %v947, %v1003
  %v1012 = vmul.f32 %v948, %v1004
  %v1013 = vmul.f32 %v949, %v1005
  %v1014 = vmul.f32 %v950, %v1006
  %v1015 = vmul.f32 %v951, %v1007
  %v1016 = vmul.f32 %v952, %v1008
  %v1017 = vld [vmem:[%s2] sm:$0xff]
  %v1018 = vld [vmem:[%s2 + $0x8] sm:$0xff]
  %v1019 = vld [vmem:[%s2 + $0x10] sm:$0xff]
  %v1020 = vld [vmem:[%s2 + $0x18] sm:$0xff]
  %v1021 = vld [vmem:[%s2 + $0x20] sm:$0xff]
  %v1022 = vld [vmem:[%s2 + $0x28] sm:$0xff]
  %v1023 = vld [vmem:[%s2 + $0x30] sm:$0xff]
  %v1024 = vld [vmem:[%s2 + $0x38] sm:$0xff]
  %1026 = vset.pattern.permute.xlu0 0
  %1027 = vperm.xlu0 %1026, %v1017
  %v1028 = vpop.permute.xlu0 %1027
  %1031 = vset.pattern.permute.xlu0 0
  %1032 = vperm.xlu0 %1031, %v1018
  %v1033 = vpop.permute.xlu0 %1032
  %1036 = vset.pattern.permute.xlu0 0
  %1037 = vperm.xlu0 %1036, %v1019
  %v1038 = vpop.permute.xlu0 %1037
  %1041 = vset.pattern.permute.xlu0 0
  %1042 = vperm.xlu0 %1041, %v1020
  %v1043 = vpop.permute.xlu0 %1042
  %1046 = vset.pattern.permute.xlu0 0
  %1047 = vperm.xlu0 %1046, %v1021
  %v1048 = vpop.permute.xlu0 %1047
  %1051 = vset.pattern.permute.xlu0 0
  %1052 = vperm.xlu0 %1051, %v1022
  %v1053 = vpop.permute.xlu0 %1052
  %1056 = vset.pattern.permute.xlu0 0
  %1057 = vperm.xlu0 %1056, %v1023
  %v1058 = vpop.permute.xlu0 %1057
  %1061 = vset.pattern.permute.xlu0 0
  %1062 = vperm.xlu0 %1061, %v1024
  %v1063 = vpop.permute.xlu0 %1062
  %v1065 = vadd.f32 %v1009, %v1028
  %v1066 = vadd.f32 %v1010, %v1033
  %v1067 = vadd.f32 %v1011, %v1038
  %v1068 = vadd.f32 %v1012, %v1043
  %v1069 = vadd.f32 %v1013, %v1048
  %v1070 = vadd.f32 %v1014, %v1053
  %v1071 = vadd.f32 %v1015, %v1058
  %v1072 = vadd.f32 %v1016, %v1063
  %vm1073 = vcmask 523264
  %v1074 = vsel %vm1073, %v1065, -inf
  %v1075 = vrot.slane %v1074, 4
  %v1076 = vmax.f32 %v1074, %v1075
  %v1077 = vrot.slane %v1076, 2
  %v1078 = vmax.f32 %v1076, %v1077
  %v1079 = vrot.slane %v1078, 1
  %v1080 = vmax.f32 %v1078, %v1079
  %v1081 = vsel %vm1073, %v1066, -inf
  %v1082 = vrot.slane %v1081, 4
  %v1083 = vmax.f32 %v1081, %v1082
  %v1084 = vrot.slane %v1083, 2
  %v1085 = vmax.f32 %v1083, %v1084
  %v1086 = vrot.slane %v1085, 1
  %v1087 = vmax.f32 %v1085, %v1086
  %v1088 = vsel %vm1073, %v1067, -inf
  %v1089 = vrot.slane %v1088, 4
  %v1090 = vmax.f32 %v1088, %v1089
  %v1091 = vrot.slane %v1090, 2
  %v1092 = vmax.f32 %v1090, %v1091
  %v1093 = vrot.slane %v1092, 1
  %v1094 = vmax.f32 %v1092, %v1093
  %v1095 = vsel %vm1073, %v1068, -inf
  %v1096 = vrot.slane %v1095, 4
  %v1097 = vmax.f32 %v1095, %v1096
  %v1098 = vrot.slane %v1097, 2
  %v1099 = vmax.f32 %v1097, %v1098
  %v1100 = vrot.slane %v1099, 1
  %v1101 = vmax.f32 %v1099, %v1100
  %v1102 = vsel %vm1073, %v1069, -inf
  %v1103 = vrot.slane %v1102, 4
  %v1104 = vmax.f32 %v1102, %v1103
  %v1105 = vrot.slane %v1104, 2
  %v1106 = vmax.f32 %v1104, %v1105
  %v1107 = vrot.slane %v1106, 1
  %v1108 = vmax.f32 %v1106, %v1107
  %v1109 = vsel %vm1073, %v1070, -inf
  %v1110 = vrot.slane %v1109, 4
  %v1111 = vmax.f32 %v1109, %v1110
  %v1112 = vrot.slane %v1111, 2
  %v1113 = vmax.f32 %v1111, %v1112
  %v1114 = vrot.slane %v1113, 1
  %v1115 = vmax.f32 %v1113, %v1114
  %v1116 = vsel %vm1073, %v1071, -inf
  %v1117 = vrot.slane %v1116, 4
  %v1118 = vmax.f32 %v1116, %v1117
  %v1119 = vrot.slane %v1118, 2
  %v1120 = vmax.f32 %v1118, %v1119
  %v1121 = vrot.slane %v1120, 1
  %v1122 = vmax.f32 %v1120, %v1121
  %v1123 = vsel %vm1073, %v1072, -inf
  %v1124 = vrot.slane %v1123, 4
  %v1125 = vmax.f32 %v1123, %v1124
  %v1126 = vrot.slane %v1125, 2
  %v1127 = vmax.f32 %v1125, %v1126
  %v1128 = vrot.slane %v1127, 1
  %v1129 = vmax.f32 %v1127, %v1128
  %vm1138 = vcmask 1041409
  %v1139 = vsel %vm1138, %v1087, %v1080
  %vm1140 = vcmask 1042434
  %v1141 = vsel %vm1140, %v1094, %v1139
  %vm1142 = vcmask 1043459
  %v1143 = vsel %vm1142, %v1101, %v1141
  %vm1144 = vcmask 1044484
  %v1145 = vsel %vm1144, %v1108, %v1143
  %vm1146 = vcmask 1045509
  %v1147 = vsel %vm1146, %v1115, %v1145
  %vm1148 = vcmask 1046534
  %v1149 = vsel %vm1148, %v1122, %v1147
  %vm1150 = vcmask 1047559
  %v1151 = vsel %vm1150, %v1129, %v1149
  %1153 = vst.msk [vmem:[%s9] sm:$0xff] %vm1073, %v1151
  // Predicated region
  $region34: #{forward.3} parent=0 // pred_check
    _
  $region35: #{forward.3} parent=0 // pred_check_branch
    %1155 = sbr.rel (0) target = $region37
  $region36: #{forward.3} parent=0 // pred_region
    _
  $region37: #{forward.3} parent=0 // pred_fallthru
    _
  // Predicated region
  $region38: #{forward.3} parent=0 // pred_check
    _
  $region39: #{forward.3} parent=0 // pred_check_branch
    %1157 = sbr.rel (0) target = $region41
  $region40: #{forward.3} parent=0 // pred_region
    _
  $region41: #{forward.3} parent=0 // pred_fallthru
    _

// kernel: forward.2
$region0: #{forward.2}
  #allocation0 [shape = 'u32[]', space=smem, size = 0x4, offset = 0x4, fixed_abs, tag = 'smem constant byte address 0x4 - core index']
  #allocation1 [shape = 'u32[72,128]{1,0:T(1,128)}', space=vmem, size = 0x9000, scoped, tag = 'internal scratch']
  #allocation2 [shape = 's32[1]{0}', space=sflag, size = 0x4, scoped, tag = 'scoped memory for forward.2']
  #allocation3 [shape = 'u8[512]{0}', space=smem, size = 0x200, scoped, tag = 'prefetched SMEM operand 0']
  %s0 = inlined_call_operand.vmem [shape: s32[3], index: 0, kind: input, shape index: {}]
  %s1 = inlined_call_operand.vmem [shape: bf16[384,128], index: 1, kind: input, shape index: {}]
  %s2 = inlined_call_operand.vmem [shape: f32[384,1], index: 2, kind: input, shape index: {}]
  %s3 = inlined_call_operand.vmem [shape: bf16[3,128,256], index: 3, kind: input, shape index: {}]
  %s4 = inlined_call_operand.vmem [shape: f32[3,1,256], index: 4, kind: input, shape index: {}]
  %s5 = inlined_call_operand.vmem [shape: bf16[256,128], index: 5, kind: input, shape index: {}]
  %s6 = inlined_call_operand.vmem [shape: f32[1,128], index: 6, kind: input, shape index: {}]
  %s7 = inlined_call_operand.vmem [shape: bf16[128,64], index: 7, kind: input, shape index: {}]
  %s8 = inlined_call_operand.vmem [shape: f32[1,64], index: 8, kind: input, shape index: {}]
  %s9 = inlined_call_operand.vmem [shape: f32[48,64], index: 9, kind: output, shape index: {}]
  %s10 = sld [smem:[#allocation0]]
  $region65: #{forward.2} parent=0
    _
  %s12 = ssub.s32 1, %s10
  %s13 = scalar_select 0, %s12, %s10
  %s15 = sshll.u32 %s0, 4
  %s16 = int_to_ptr.vmem [resolvable:$true] %s15
  %18 = dma.vmem_to_smem %s16, 16, [#allocation3], [#allocation2]
  %20 = dma.done [#allocation2], 16
  %21 = sfence
  loop: start=0, step=1, limit=5
  $region2: #{forward.2} parent=0 // loop_pre_header
    _
  $region3: #{forward.2} parent=0 // loop_header
    %s23 = sphi 0, %s27
    %p24 = scmp.ge.s32.totalorder %s23, 5
    %s33 = sphi 0, %s35
    %s36 = sphi 0, %s33
    %s37 = sphi 0, %s36
    %s53 = sphi 0, %s37
    %s59 = sphi 0, %s61
    %s62 = sphi 0, %s59
    %s63 = sphi 0, %s62
    %s79 = sphi 0, %s63
    %s87 = sphi 0, %s89
    %s90 = sphi 0, %s87
    %s91 = sphi 0, %s90
    %s107 = sphi 0, %s91
    %s115 = sphi 0, %s117
    %s118 = sphi 0, %s115
    %s119 = sphi 0, %s118
    %s135 = sphi 0, %s119
    %s139 = sphi 0, %s139
    %s141 = sphi 0, %s139
    %s142 = sphi 0, %s141
    %s156 = sphi 0, %s142
    %s160 = sphi 0, %s160
    %s162 = sphi 0, %s160
    %s163 = sphi 0, %s162
    %s177 = sphi 0, %s163
    %s181 = sphi 0, %s181
    %s183 = sphi 0, %s181
    %s184 = sphi 0, %s183
    %s198 = sphi 0, %s184
    %s202 = sphi 0, %s202
    %s204 = sphi 0, %s202
    %s205 = sphi 0, %s204
    %s219 = sphi 0, %s205
    %s225 = sphi 0, %s227
    %s228 = sphi 0, %s225
    %s229 = sphi 0, %s228
    %s245 = sphi 0, %s229
  $region4: #{forward.2} parent=0 // loop_header_branch
    %26 = sbr.rel (%p24) target = $region8
  $region5: #{forward.2} parent=0 // loop_body
    %s28 = ssub.s32 %s23, 1
    %s29 = ssub.s32 %s23, 2
    %s30 = sadd.s32 %s23, 1
    %s31 = ssub.s32 %s23, %s30
    %p32 = scmp.eq.s32.totalorder %s31, 0
    %s34 = sadd.s32 %s33, 1
    %s35 = scalar_select %p32, %s33, %s34
    %p38 = pneg %p32
    %p39 = scmp.eq.s32.totalorder %s23, 2
    %p40 = por %p38, %p39
    %p41 = scmp.ne.s32.totalorder %s33, %s36
    %p42 = scmp.eq.s32.totalorder %s23, 0
    %p43 = por %p41, %p42
    %p44 = scmp.ne.s32.totalorder %s33, %s36
    %p45 = scmp.eq.s32.totalorder %s28, 2
    %p46 = por %p44, %p45
    %p47 = scmp.ne.s32.totalorder %s36, %s37
    %p48 = scmp.eq.s32.totalorder %s28, 0
    %p49 = por %p47, %p48
    %p50 = scmp.ne.s32.totalorder %s36, %s37
    %p51 = scmp.eq.s32.totalorder %s29, 2
    %p52 = por %p50, %p51
    %p54 = scmp.ne.s32.totalorder %s37, %s53
    %p55 = scmp.eq.s32.totalorder %s29, 0
    %p56 = por %p54, %p55
    %s57 = ssub.s32 %s23, %s30
    %p58 = scmp.eq.s32.totalorder %s57, 0
    %s60 = sadd.s32 %s59, 1
    %s61 = scalar_select %p58, %s59, %s60
    %p64 = pneg %p58
    %p65 = scmp.eq.s32.totalorder %s23, 2
    %p66 = por %p64, %p65
    %p67 = scmp.ne.s32.totalorder %s59, %s62
    %p68 = scmp.eq.s32.totalorder %s23, 0
    %p69 = por %p67, %p68
    %p70 = scmp.ne.s32.totalorder %s59, %s62
    %p71 = scmp.eq.s32.totalorder %s28, 2
    %p72 = por %p70, %p71
    %p73 = scmp.ne.s32.totalorder %s62, %s63
    %p74 = scmp.eq.s32.totalorder %s28, 0
    %p75 = por %p73, %p74
    %p76 = scmp.ne.s32.totalorder %s62, %s63
    %p77 = scmp.eq.s32.totalorder %s29, 2
    %p78 = por %p76, %p77
    %p80 = scmp.ne.s32.totalorder %s63, %s79
    %p81 = scmp.eq.s32.totalorder %s29, 0
    %p82 = por %p80, %p81
    %s83 = sld [smem:[#allocation3 + %s23]]
    %s84 = sld [smem:[#allocation3 + %s30]]
    %s85 = ssub.s32 %s83, %s84
    %p86 = scmp.eq.s32.totalorder %s85, 0
    %s88 = sadd.s32 %s87, 1
    %s89 = scalar_select %p86, %s87, %s88
    %p92 = pneg %p86
    %p93 = scmp.eq.s32.totalorder %s23, 2
    %p94 = por %p92, %p93
    %p95 = scmp.ne.s32.totalorder %s87, %s90
    %p96 = scmp.eq.s32.totalorder %s23, 0
    %p97 = por %p95, %p96
    %p98 = scmp.ne.s32.totalorder %s87, %s90
    %p99 = scmp.eq.s32.totalorder %s28, 2
    %p100 = por %p98, %p99
    %p101 = scmp.ne.s32.totalorder %s90, %s91
    %p102 = scmp.eq.s32.totalorder %s28, 0
    %p103 = por %p101, %p102
    %p104 = scmp.ne.s32.totalorder %s90, %s91
    %p105 = scmp.eq.s32.totalorder %s29, 2
    %p106 = por %p104, %p105
    %p108 = scmp.ne.s32.totalorder %s91, %s107
    %p109 = scmp.eq.s32.totalorder %s29, 0
    %p110 = por %p108, %p109
    %s111 = sld [smem:[#allocation3 + %s23]]
    %s112 = sld [smem:[#allocation3 + %s30]]
    %s113 = ssub.s32 %s111, %s112
    %p114 = scmp.eq.s32.totalorder %s113, 0
    %s116 = sadd.s32 %s115, 1
    %s117 = scalar_select %p114, %s115, %s116
    %p120 = pneg %p114
    %p121 = scmp.eq.s32.totalorder %s23, 2
    %p122 = por %p120, %p121
    %p123 = scmp.ne.s32.totalorder %s115, %s118
    %p124 = scmp.eq.s32.totalorder %s23, 0
    %p125 = por %p123, %p124
    %p126 = scmp.ne.s32.totalorder %s115, %s118
    %p127 = scmp.eq.s32.totalorder %s28, 2
    %p128 = por %p126, %p127
    %p129 = scmp.ne.s32.totalorder %s118, %s119
    %p130 = scmp.eq.s32.totalorder %s28, 0
    %p131 = por %p129, %p130
    %p132 = scmp.ne.s32.totalorder %s118, %s119
    %p133 = scmp.eq.s32.totalorder %s29, 2
    %p134 = por %p132, %p133
    %p136 = scmp.ne.s32.totalorder %s119, %s135
    %p137 = scmp.eq.s32.totalorder %s29, 0
    %p138 = por %p136, %p137
    %s140 = sadd.s32 %s139, 1
    %p143 = scmp.eq.s32.totalorder %s23, 2
    %p144 = scmp.ne.s32.totalorder %s139, %s141
    %p145 = scmp.eq.s32.totalorder %s23, 0
    %p146 = por %p144, %p145
    %p147 = scmp.ne.s32.totalorder %s139, %s141
    %p148 = scmp.eq.s32.totalorder %s28, 2
    %p149 = por %p147, %p148
    %p150 = scmp.ne.s32.totalorder %s141, %s142
    %p151 = scmp.eq.s32.totalorder %s28, 0
    %p152 = por %p150, %p151
    %p153 = scmp.ne.s32.totalorder %s141, %s142
    %p154 = scmp.eq.s32.totalorder %s29, 2
    %p155 = por %p153, %p154
    %p157 = scmp.ne.s32.totalorder %s142, %s156
    %p158 = scmp.eq.s32.totalorder %s29, 0
    %p159 = por %p157, %p158
    %s161 = sadd.s32 %s160, 1
    %p164 = scmp.eq.s32.totalorder %s23, 2
    %p165 = scmp.ne.s32.totalorder %s160, %s162
    %p166 = scmp.eq.s32.totalorder %s23, 0
    %p167 = por %p165, %p166
    %p168 = scmp.ne.s32.totalorder %s160, %s162
    %p169 = scmp.eq.s32.totalorder %s28, 2
    %p170 = por %p168, %p169
    %p171 = scmp.ne.s32.totalorder %s162, %s163
    %p172 = scmp.eq.s32.totalorder %s28, 0
    %p173 = por %p171, %p172
    %p174 = scmp.ne.s32.totalorder %s162, %s163
    %p175 = scmp.eq.s32.totalorder %s29, 2
    %p176 = por %p174, %p175
    %p178 = scmp.ne.s32.totalorder %s163, %s177
    %p179 = scmp.eq.s32.totalorder %s29, 0
    %p180 = por %p178, %p179
    %s182 = sadd.s32 %s181, 1
    %p185 = scmp.eq.s32.totalorder %s23, 2
    %p186 = scmp.ne.s32.totalorder %s181, %s183
    %p187 = scmp.eq.s32.totalorder %s23, 0
    %p188 = por %p186, %p187
    %p189 = scmp.ne.s32.totalorder %s181, %s183
    %p190 = scmp.eq.s32.totalorder %s28, 2
    %p191 = por %p189, %p190
    %p192 = scmp.ne.s32.totalorder %s183, %s184
    %p193 = scmp.eq.s32.totalorder %s28, 0
    %p194 = por %p192, %p193
    %p195 = scmp.ne.s32.totalorder %s183, %s184
    %p196 = scmp.eq.s32.totalorder %s29, 2
    %p197 = por %p195, %p196
    %p199 = scmp.ne.s32.totalorder %s184, %s198
    %p200 = scmp.eq.s32.totalorder %s29, 0
    %p201 = por %p199, %p200
    %s203 = sadd.s32 %s202, 1
    %p206 = scmp.eq.s32.totalorder %s23, 2
    %p207 = scmp.ne.s32.totalorder %s202, %s204
    %p208 = scmp.eq.s32.totalorder %s23, 0
    %p209 = por %p207, %p208
    %p210 = scmp.ne.s32.totalorder %s202, %s204
    %p211 = scmp.eq.s32.totalorder %s28, 2
    %p212 = por %p210, %p211
    %p213 = scmp.ne.s32.totalorder %s204, %s205
    %p214 = scmp.eq.s32.totalorder %s28, 0
    %p215 = por %p213, %p214
    %p216 = scmp.ne.s32.totalorder %s204, %s205
    %p217 = scmp.eq.s32.totalorder %s29, 2
    %p218 = por %p216, %p217
    %p220 = scmp.ne.s32.totalorder %s205, %s219
    %p221 = scmp.eq.s32.totalorder %s29, 0
    %p222 = por %p220, %p221
    %s223 = ssub.s32 %s23, %s30
    %p224 = scmp.eq.s32.totalorder %s223, 0
    %s226 = sadd.s32 %s225, 1
    %s227 = scalar_select %p224, %s225, %s226
    %p230 = pneg %p224
    %p231 = scmp.eq.s32.totalorder %s23, 2
    %p232 = por %p230, %p231
    %p233 = scmp.ne.s32.totalorder %s225, %s228
    %p234 = scmp.eq.s32.totalorder %s23, 0
    %p235 = por %p233, %p234
    %p236 = scmp.ne.s32.totalorder %s225, %s228
    %p237 = scmp.eq.s32.totalorder %s28, 2
    %p238 = por %p236, %p237
    %p239 = scmp.ne.s32.totalorder %s228, %s229
    %p240 = scmp.eq.s32.totalorder %s28, 0
    %p241 = por %p239, %p240
    %p242 = scmp.ne.s32.totalorder %s228, %s229
    %p243 = scmp.eq.s32.totalorder %s29, 2
    %p244 = por %p242, %p243
    %p246 = scmp.ne.s32.totalorder %s229, %s245
    %p247 = scmp.eq.s32.totalorder %s29, 0
    %p248 = por %p246, %p247
    %p249 = scmp.le.s32.totalorder 1, %s23
    %p250 = scmp.lt.s32.totalorder %s23, 4
    %p251 = pnand %p249, %p250
    %p252 = pneg %p251
    // Predicated region
    $region9: #{forward.2} parent=5 // pred_check
      _
    $region10: #{forward.2} parent=5 // pred_check_branch
      %254 = sbr.rel (%p251) target = $region12
    $region11: #{forward.2} parent=5 // pred_region
      %s255 = ssub.s32 %s23, 1
      // Predicated region
      $region13: #{forward.2} parent=11 // pred_check
        %p256 = pneg %p152
      $region14: #{forward.2} parent=11 // pred_check_branch
        %258 = sbr.rel (%p256) target = $region16
      $region15: #{forward.2} parent=11 // pred_region
        _
      $region16: #{forward.2} parent=11 // pred_fallthru
        _
      // Predicated region
      $region17: #{forward.2} parent=11 // pred_check
        %p259 = pneg %p173
      $region18: #{forward.2} parent=11 // pred_check_branch
        %261 = sbr.rel (%p259) target = $region20
      $region19: #{forward.2} parent=11 // pred_region
        _
      $region20: #{forward.2} parent=11 // pred_fallthru
        _
      // Predicated region
      $region21: #{forward.2} parent=11 // pred_check
        %p262 = pneg %p194
      $region22: #{forward.2} parent=11 // pred_check_branch
        %264 = sbr.rel (%p262) target = $region24
      $region23: #{forward.2} parent=11 // pred_region
        _
      $region24: #{forward.2} parent=11 // pred_fallthru
        _
      // Predicated region
      $region25: #{forward.2} parent=11 // pred_check
        %p265 = pneg %p215
      $region26: #{forward.2} parent=11 // pred_check_branch
        %267 = sbr.rel (%p265) target = $region28
      $region27: #{forward.2} parent=11 // pred_region
        _
      $region28: #{forward.2} parent=11 // pred_fallthru
        _
    $region12: #{forward.2} parent=5 // pred_fallthru
      _
    %p268 = scmp.lt.s32.totalorder %s23, 3
    // Predicated region
    $region29: #{forward.2} parent=5 // pred_check
      %p269 = pneg %p268
    $region30: #{forward.2} parent=5 // pred_check_branch
      %271 = sbr.rel (%p269) target = $region32
    $region31: #{forward.2} parent=5 // pred_region
      // Predicated region
      $region33: #{forward.2} parent=31 // pred_check
        %p272 = pneg %p43
      $region34: #{forward.2} parent=31 // pred_check_branch
        %274 = sbr.rel (%p272) target = $region36
      $region35: #{forward.2} parent=31 // pred_region
        %s275 = smul.u32 16, %s23
        %p276 = scmp.lt.s32.totalorder %s275, 47
        %s277 = scalar_select %p276, %s275, 47
        %s278 = smul.addr %s277, 4
        %s279 = scalar_lea.vmem %s1, %s278
        %s280 = smul.u32 16, %s23
      $region36: #{forward.2} parent=31 // pred_fallthru
        _
      // Predicated region
      $region37: #{forward.2} parent=31 // pred_check
        %p281 = pneg %p69
      $region38: #{forward.2} parent=31 // pred_check_branch
        %283 = sbr.rel (%p281) target = $region40
      $region39: #{forward.2} parent=31 // pred_region
        %s284 = smul.u32 16, %s23
        %p285 = scmp.lt.s32.totalorder %s284, 47
        %s286 = scalar_select %p285, %s284, 47
        %s287 = smul.addr %s286, 8
        %s288 = scalar_lea.vmem %s2, %s287
        %s289 = smul.u32 16, %s23
      $region40: #{forward.2} parent=31 // pred_fallthru
        _
      // Predicated region
      $region41: #{forward.2} parent=31 // pred_check
        %p290 = pneg %p97
      $region42: #{forward.2} parent=31 // pred_check_branch
        %292 = sbr.rel (%p290) target = $region44
      $region43: #{forward.2} parent=31 // pred_region
        %s293 = sld [smem:[#allocation3 + %s23]]
        %p294 = scmp.lt.s32.totalorder %s293, 2
        %s295 = scalar_select %p294, %s293, 2
        %s296 = smul.addr %s295, 32
        %s297 = smul.addr %s296, 4
        %s298 = scalar_lea.vmem %s3, %s297
        %s299 = sld [smem:[#allocation3 + %s23]]
      $region44: #{forward.2} parent=31 // pred_fallthru
        _
      // Predicated region
      $region45: #{forward.2} parent=31 // pred_check
        %p300 = pneg %p125
      $region46: #{forward.2} parent=31 // pred_check_branch
        %302 = sbr.rel (%p300) target = $region48
      $region47: #{forward.2} parent=31 // pred_region
        %s303 = sld [smem:[#allocation3 + %s23]]
        %p304 = scmp.lt.s32.totalorder %s303, 2
        %s305 = scalar_select %p304, %s303, 2
        %s306 = smul.addr %s305, 2
        %s307 = scalar_lea.vmem %s4, %s306
        %s308 = sld [smem:[#allocation3 + %s23]]
      $region48: #{forward.2} parent=31 // pred_fallthru
        _
    $region32: #{forward.2} parent=5 // pred_fallthru
      _
    %p309 = scmp.le.s32.totalorder 1, %s23
    %p310 = scmp.lt.s32.totalorder %s23, 4
    %p311 = pnand %p309, %p310
    %p312 = pneg %p311
    // Predicated region
    $region49: #{forward.2} parent=5 // pred_check
      _
    $region50: #{forward.2} parent=5 // pred_check_branch
      %314 = sbr.rel (%p311) target = $region52
    $region51: #{forward.2} parent=5 // pred_region
      %s315 = ssub.s32 %s23, 1
      %s316 = smul.u32 16, %s28
      %p317 = scmp.lt.s32.totalorder %s316, 47
      %s318 = scalar_select %p317, %s316, 47
      %s319 = smul.addr %s318, 4
      %s320 = scalar_lea.vmem %s1, %s319
      %p321 = pneg %p49
      %p322 = pneg %p46
      %s323 = smul.u32 16, %s28
      %p324 = scmp.lt.s32.totalorder %s323, 47
      %s325 = scalar_select %p324, %s323, 47
      %s326 = smul.addr %s325, 8
      %s327 = scalar_lea.vmem %s2, %s326
      %p328 = pneg %p75
      %p329 = pneg %p72
      %s330 = sld [smem:[#allocation3 + %s28]]
      %p331 = scmp.lt.s32.totalorder %s330, 2
      %s332 = scalar_select %p331, %s330, 2
      %s333 = smul.addr %s332, 32
      %s334 = smul.addr %s333, 4
      %s335 = scalar_lea.vmem %s3, %s334
      %p336 = pneg %p103
      %p337 = pneg %p100
      %s338 = sld [smem:[#allocation3 + %s28]]
      %p339 = scmp.lt.s32.totalorder %s338, 2
      %s340 = scalar_select %p339, %s338, 2
      %s341 = smul.addr %s340, 2
      %s342 = scalar_lea.vmem %s4, %s341
      %p343 = pneg %p131
      %p344 = pneg %p128
      %p345 = pneg %p152
      %p346 = pneg %p149
      %p347 = pneg %p173
      %p348 = pneg %p170
      %p349 = pneg %p194
      %p350 = pneg %p191
      %p351 = pneg %p215
      %p352 = pneg %p212
      %p353 = pneg %p241
      %p354 = pneg %p238
      %s355 = smul.u32 2, %s28
      %p356 = scmp.lt.s32.totalorder %s355, 5
      %s357 = scalar_select %p356, %s355, 5
      %s358 = smul.addr %s357, 8
      %s359 = scalar_lea.vmem %s9, %s358
      %s360 = smul.u32 16, %s28
      %p361 = scmp.lt.s32.totalorder %s360, 47
      %s362 = scalar_select %p361, %s360, 47
      %s363 = smul.addr %s362, 4
      %s364 = scalar_lea.vmem %s1, %s363
      %s365 = smul.u32 16, %s28
      %s366 = smul.u32 16, %s28
      %p367 = scmp.lt.s32.totalorder %s366, 47
      %s368 = scalar_select %p367, %s366, 47
      %s369 = smul.addr %s368, 8
      %s370 = scalar_lea.vmem %s2, %s369
      %s371 = smul.u32 16, %s28
      %s372 = sld [smem:[#allocation3 + %s28]]
      %p373 = scmp.lt.s32.totalorder %s372, 2
      %s374 = scalar_select %p373, %s372, 2
      %s375 = smul.addr %s374, 32
      %s376 = smul.addr %s375, 4
      %s377 = scalar_lea.vmem %s3, %s376
      %s378 = sld [smem:[#allocation3 + %s28]]
      %s379 = sld [smem:[#allocation3 + %s28]]
      %p380 = scmp.lt.s32.totalorder %s379, 2
      %s381 = scalar_select %p380, %s379, 2
      %s382 = smul.addr %s381, 2
      %s383 = scalar_lea.vmem %s4, %s382
      %s384 = sld [smem:[#allocation3 + %s28]]
      %s385 = smul.u32 2, %s28
      %p386 = scmp.lt.s32.totalorder %s385, 5
      %s387 = scalar_select %p386, %s385, 5
      %s388 = smul.addr %s387, 8
      %s389 = scalar_lea.vmem %s9, %s388
      %s390 = smul.u32 2, %s28
      %v391 = vld [vmem:[%s364] sm:$0xf]
      %v392 = vld [vmem:[%s364 + $0x4] sm:$0xf]
      %v393 = vld [vmem:[%s364 + $0x8] sm:$0xf]
      %v394 = vld [vmem:[%s364 + $0xc] sm:$0xf]
      %v395 = vld [vmem:[%s364 + $0x10] sm:$0xf]
      %v396 = vld [vmem:[%s364 + $0x14] sm:$0xf]
      %v397 = vld [vmem:[%s364 + $0x18] sm:$0xf]
      %v398 = vld [vmem:[%s364 + $0x1c] sm:$0xf]
      %v399 = vld [vmem:[%s364 + $0x20] sm:$0xf]
      %v400 = vld [vmem:[%s364 + $0x24] sm:$0xf]
      %v401 = vld [vmem:[%s364 + $0x28] sm:$0xf]
      %v402 = vld [vmem:[%s364 + $0x2c] sm:$0xf]
      %v403 = vld [vmem:[%s364 + $0x30] sm:$0xf]
      %v404 = vld [vmem:[%s364 + $0x34] sm:$0xf]
      %v405 = vld [vmem:[%s364 + $0x38] sm:$0xf]
      %v406 = vld [vmem:[%s364 + $0x3c] sm:$0xf]
      %v407 = vld [vmem:[%s377] sm:$0xff]
      %v408 = vld [vmem:[%s377 + $0x8] sm:$0xff]
      %v409 = vld [vmem:[%s377 + $0x10] sm:$0xff]
      %v410 = vld [vmem:[%s377 + $0x18] sm:$0xff]
      %v411 = vld [vmem:[%s377 + $0x20] sm:$0xff]
      %v412 = vld [vmem:[%s377 + $0x28] sm:$0xff]
      %v413 = vld [vmem:[%s377 + $0x30] sm:$0xff]
      %v414 = vld [vmem:[%s377 + $0x38] sm:$0xff]
      %v415 = vld [vmem:[%s377 + $0x40] sm:$0xff]
      %v416 = vld [vmem:[%s377 + $0x48] sm:$0xff]
      %v417 = vld [vmem:[%s377 + $0x50] sm:$0xff]
      %v418 = vld [vmem:[%s377 + $0x58] sm:$0xff]
      %v419 = vld [vmem:[%s377 + $0x60] sm:$0xff]
      %v420 = vld [vmem:[%s377 + $0x68] sm:$0xff]
      %v421 = vld [vmem:[%s377 + $0x70] sm:$0xff]
      %v422 = vld [vmem:[%s377 + $0x78] sm:$0xff]
      %v423 = vld [vmem:[%s383] sm:$0x3]
      %v425 = vperm.slane %v423, 0
      %v426 = vperm.slane %v423, 1
      %v445 = vunpack.c.l.b16 %v391
      %v446 = vunpack.c.l.b16 %v392
      %v447 = vunpack.c.l.b16 %v393
      %v448 = vunpack.c.l.b16 %v394
      %v449 = vunpack.c.l.b16 %v395
      %v450 = vunpack.c.l.b16 %v396
      %v451 = vunpack.c.l.b16 %v397
      %v452 = vunpack.c.l.b16 %v398
      %v453 = vunpack.c.l.b16 %v399
      %v454 = vunpack.c.l.b16 %v400
      %v455 = vunpack.c.l.b16 %v401
      %v456 = vunpack.c.l.b16 %v402
      %v457 = vunpack.c.l.b16 %v403
      %v458 = vunpack.c.l.b16 %v404
      %v459 = vunpack.c.l.b16 %v405
      %v460 = vunpack.c.l.b16 %v406
      %v461 = vpack.c.b16 %v446, %v445
      %v462 = vpack.c.b16 %v448, %v447
      %v463 = vpack.c.b16 %v450, %v449
      %v464 = vpack.c.b16 %v452, %v451
      %v465 = vpack.c.b16 %v454, %v453
      %v466 = vpack.c.b16 %v456, %v455
      %v467 = vpack.c.b16 %v458, %v457
      %v468 = vpack.c.b16 %v460, %v459
      %v493 = vunpack.c.l.b16 %v407
      %v494 = vunpack.c.h.b16 %v407
      %v495 = vunpack.c.l.b16 %v408
      %v496 = vunpack.c.h.b16 %v408
      %v497 = vunpack.c.l.b16 %v409
      %v498 = vunpack.c.h.b16 %v409
      %v499 = vunpack.c.l.b16 %v410
      %v500 = vunpack.c.h.b16 %v410
      %v501 = vunpack.c.l.b16 %v411
      %v502 = vunpack.c.h.b16 %v411
      %v503 = vunpack.c.l.b16 %v412
      %v504 = vunpack.c.h.b16 %v412
      %v505 = vunpack.c.l.b16 %v413
      %v506 = vunpack.c.h.b16 %v413
      %v507 = vunpack.c.l.b16 %v414
      %v508 = vunpack.c.h.b16 %v414
      %v509 = vunpack.c.l.b16 %v415
      %v510 = vunpack.c.h.b16 %v415
      %v511 = vunpack.c.l.b16 %v416
      %v512 = vunpack.c.h.b16 %v416
      %v513 = vunpack.c.l.b16 %v417
      %v514 = vunpack.c.h.b16 %v417
      %v515 = vunpack.c.l.b16 %v418
      %v516 = vunpack.c.h.b16 %v418
      %v517 = vunpack.c.l.b16 %v419
      %v518 = vunpack.c.h.b16 %v419
      %v519 = vunpack.c.l.b16 %v420
      %v520 = vunpack.c.h.b16 %v420
      %v521 = vunpack.c.l.b16 %v421
      %v522 = vunpack.c.h.b16 %v421
      %v523 = vunpack.c.l.b16 %v422
      %v524 = vunpack.c.h.b16 %v422
      %v525 = vpack.c.b16 %v495, %v493
      %v526 = vpack.c.b16 %v496, %v494
      %v527 = vpack.c.b16 %v499, %v497
      %v528 = vpack.c.b16 %v500, %v498
      %v529 = vpack.c.b16 %v503, %v501
      %v530 = vpack.c.b16 %v504, %v502
      %v531 = vpack.c.b16 %v507, %v505
      %v532 = vpack.c.b16 %v508, %v506
      %v533 = vpack.c.b16 %v511, %v509
      %v534 = vpack.c.b16 %v512, %v510
      %v535 = vpack.c.b16 %v515, %v513
      %v536 = vpack.c.b16 %v516, %v514
      %v537 = vpack.c.b16 %v519, %v517
      %v538 = vpack.c.b16 %v520, %v518
      %v539 = vpack.c.b16 %v523, %v521
      %v540 = vpack.c.b16 %v524, %v522
      %557 = vmatpush.bf16.msra.mxu0 %v539
      %558 = vmatpush.bf16.msra.mxu0 %v537
      %559 = vmatpush.bf16.msra.mxu0 %v535
      %560 = vmatpush.bf16.msra.mxu0 %v533
      %561 = vmatpush.bf16.msra.mxu0 %v531
      %562 = vmatpush.bf16.msra.mxu0 %v529
      %563 = vmatpush.bf16.msra.mxu0 %v527
      %564 = vmatpush.bf16.msra.mxu0 %v525
      %565 = vmatmul.bf16.gmra.mxu0 %v461
      %v566 = vpop.f32.mrf.mxu0
      %v567 = vadd.f32 %v425, %v566
      %v568 = vpop.f32.mrf.mxu0
      %v569 = vadd.f32 %v425, %v568
      %570 = vmatmul.bf16.gmra.mxu0 %v462
      %v571 = vpop.f32.mrf.mxu0
      %v572 = vadd.f32 %v425, %v571
      %v573 = vpop.f32.mrf.mxu0
      %v574 = vadd.f32 %v425, %v573
      %575 = vmatmul.bf16.gmra.mxu0 %v463
      %v576 = vpop.f32.mrf.mxu0
      %v577 = vadd.f32 %v425, %v576
      %v578 = vpop.f32.mrf.mxu0
      %v579 = vadd.f32 %v425, %v578
      %580 = vmatmul.bf16.gmra.mxu0 %v464
      %v581 = vpop.f32.mrf.mxu0
      %v582 = vadd.f32 %v425, %v581
      %v583 = vpop.f32.mrf.mxu0
      %v584 = vadd.f32 %v425, %v583
      %585 = vmatmul.bf16.gmra.mxu0 %v465
      %v586 = vpop.f32.mrf.mxu0
      %v587 = vadd.f32 %v425, %v586
      %v588 = vpop.f32.mrf.mxu0
      %v589 = vadd.f32 %v425, %v588
      %590 = vmatmul.bf16.gmra.mxu0 %v466
      %v591 = vpop.f32.mrf.mxu0
      %v592 = vadd.f32 %v425, %v591
      %v593 = vpop.f32.mrf.mxu0
      %v594 = vadd.f32 %v425, %v593
      %595 = vmatmul.bf16.gmra.mxu0 %v467
      %v596 = vpop.f32.mrf.mxu0
      %v597 = vadd.f32 %v425, %v596
      %v598 = vpop.f32.mrf.mxu0
      %v599 = vadd.f32 %v425, %v598
      %600 = vmatmul.bf16.gmra.mxu0 %v468
      %v601 = vpop.f32.mrf.mxu0
      %v602 = vadd.f32 %v425, %v601
      %v603 = vpop.f32.mrf.mxu0
      %v604 = vadd.f32 %v425, %v603
      %605 = vdwg.mxu0
      %606 = vmatpush.bf16.msra.mxu0 %v540
      %607 = vmatpush.bf16.msra.mxu0 %v538
      %608 = vmatpush.bf16.msra.mxu0 %v536
      %609 = vmatpush.bf16.msra.mxu0 %v534
      %610 = vmatpush.bf16.msra.mxu0 %v532
      %611 = vmatpush.bf16.msra.mxu0 %v530
      %612 = vmatpush.bf16.msra.mxu0 %v528
      %613 = vmatpush.bf16.msra.mxu0 %v526
      %614 = vmatmul.bf16.gmra.mxu0 %v461
      %v615 = vpop.f32.mrf.mxu0
      %v616 = vadd.f32 %v426, %v615
      %v617 = vpop.f32.mrf.mxu0
      %v618 = vadd.f32 %v426, %v617
      %619 = vmatmul.bf16.gmra.mxu0 %v462
      %v620 = vpop.f32.mrf.mxu0
      %v621 = vadd.f32 %v426, %v620
      %v622 = vpop.f32.mrf.mxu0
      %v623 = vadd.f32 %v426, %v622
      %624 = vmatmul.bf16.gmra.mxu0 %v463
      %v625 = vpop.f32.mrf.mxu0
      %v626 = vadd.f32 %v426, %v625
      %v627 = vpop.f32.mrf.mxu0
      %v628 = vadd.f32 %v426, %v627
      %629 = vmatmul.bf16.gmra.mxu0 %v464
      %v630 = vpop.f32.mrf.mxu0
      %v631 = vadd.f32 %v426, %v630
      %v632 = vpop.f32.mrf.mxu0
      %v633 = vadd.f32 %v426, %v632
      %634 = vmatmul.bf16.gmra.mxu0 %v465
      %v635 = vpop.f32.mrf.mxu0
      %v636 = vadd.f32 %v426, %v635
      %v637 = vpop.f32.mrf.mxu0
      %v638 = vadd.f32 %v426, %v637
      %639 = vmatmul.bf16.gmra.mxu0 %v466
      %v640 = vpop.f32.mrf.mxu0
      %v641 = vadd.f32 %v426, %v640
      %v642 = vpop.f32.mrf.mxu0
      %v643 = vadd.f32 %v426, %v642
      %644 = vmatmul.bf16.gmra.mxu0 %v467
      %v645 = vpop.f32.mrf.mxu0
      %v646 = vadd.f32 %v426, %v645
      %v647 = vpop.f32.mrf.mxu0
      %v648 = vadd.f32 %v426, %v647
      %649 = vmatmul.bf16.gmra.mxu0 %v468
      %v650 = vpop.f32.mrf.mxu0
      %v651 = vadd.f32 %v426, %v650
      %v652 = vpop.f32.mrf.mxu0
      %v653 = vadd.f32 %v426, %v652
      %654 = vdwg.mxu0
      %v655 = vmul.f32 %v567, 0.5
      %v656 = vmul.f32 %v616, 0.5
      %v657 = vmul.f32 %v569, 0.5
      %v658 = vmul.f32 %v618, 0.5
      %v659 = vmul.f32 %v572, 0.5
      %v660 = vmul.f32 %v621, 0.5
      %v661 = vmul.f32 %v574, 0.5
      %v662 = vmul.f32 %v623, 0.5
      %v663 = vmul.f32 %v577, 0.5
      %v664 = vmul.f32 %v626, 0.5
      %v665 = vmul.f32 %v579, 0.5
      %v666 = vmul.f32 %v628, 0.5
      %v667 = vmul.f32 %v582, 0.5
      %v668 = vmul.f32 %v631, 0.5
      %v669 = vmul.f32 %v584, 0.5
      %v670 = vmul.f32 %v633, 0.5
      %v671 = vmul.f32 %v587, 0.5
      %v672 = vmul.f32 %v636, 0.5
      %v673 = vmul.f32 %v589, 0.5
      %v674 = vmul.f32 %v638, 0.5
      %v675 = vmul.f32 %v592, 0.5
      %v676 = vmul.f32 %v641, 0.5
      %v677 = vmul.f32 %v594, 0.5
      %v678 = vmul.f32 %v643, 0.5
      %v679 = vmul.f32 %v597, 0.5
      %v680 = vmul.f32 %v646, 0.5
      %v681 = vmul.f32 %v599, 0.5
      %v682 = vmul.f32 %v648, 0.5
      %v683 = vmul.f32 %v602, 0.5
      %v684 = vmul.f32 %v651, 0.5
      %v685 = vmul.f32 %v604, 0.5
      %v686 = vmul.f32 %v653, 0.5
      %v687 = vmul.f32 %v567, %v567
      %v688 = vmul.f32 %v616, %v616
      %v689 = vmul.f32 %v569, %v569
      %v690 = vmul.f32 %v618, %v618
      %v691 = vmul.f32 %v572, %v572
      %v692 = vmul.f32 %v621, %v621
      %v693 = vmul.f32 %v574, %v574
      %v694 = vmul.f32 %v623, %v623
      %v695 = vmul.f32 %v577, %v577
      %v696 = vmul.f32 %v626, %v626
      %v697 = vmul.f32 %v579, %v579
      %v698 = vmul.f32 %v628, %v628
      %v699 = vmul.f32 %v582, %v582
      %v700 = vmul.f32 %v631, %v631
      %v701 = vmul.f32 %v584, %v584
      %v702 = vmul.f32 %v633, %v633
      %v703 = vmul.f32 %v587, %v587
      %v704 = vmul.f32 %v636, %v636
      %v705 = vmul.f32 %v589, %v589
      %v706 = vmul.f32 %v638, %v638
      %v707 = vmul.f32 %v592, %v592
      %v708 = vmul.f32 %v641, %v641
      %v709 = vmul.f32 %v594, %v594
      %v710 = vmul.f32 %v643, %v643
      %v711 = vmul.f32 %v597, %v597
      %v712 = vmul.f32 %v646, %v646
      %v713 = vmul.f32 %v599, %v599
      %v714 = vmul.f32 %v648, %v648
      %v715 = vmul.f32 %v602, %v602
      %v716 = vmul.f32 %v651, %v651
      %v717 = vmul.f32 %v604, %v604
      %v718 = vmul.f32 %v653, %v653
      %v719 = vmul.f32 %v687, %v567
      %v720 = vmul.f32 %v688, %v616
      %v721 = vmul.f32 %v689, %v569
      %v722 = vmul.f32 %v690, %v618
      %v723 = vmul.f32 %v691, %v572
      %v724 = vmul.f32 %v692, %v621
      %v725 = vmul.f32 %v693, %v574
      %v726 = vmul.f32 %v694, %v623
      %v727 = vmul.f32 %v695, %v577
      %v728 = vmul.f32 %v696, %v626
      %v729 = vmul.f32 %v697, %v579
      %v730 = vmul.f32 %v698, %v628
      %v731 = vmul.f32 %v699, %v582
      %v732 = vmul.f32 %v700, %v631
      %v733 = vmul.f32 %v701, %v584
      %v734 = vmul.f32 %v702, %v633
      %v735 = vmul.f32 %v703, %v587
      %v736 = vmul.f32 %v704, %v636
      %v737 = vmul.f32 %v705, %v589
      %v738 = vmul.f32 %v706, %v638
      %v739 = vmul.f32 %v707, %v592
      %v740 = vmul.f32 %v708, %v641
      %v741 = vmul.f32 %v709, %v594
      %v742 = vmul.f32 %v710, %v643
      %v743 = vmul.f32 %v711, %v597
      %v744 = vmul.f32 %v712, %v646
      %v745 = vmul.f32 %v713, %v599
      %v746 = vmul.f32 %v714, %v648
      %v747 = vmul.f32 %v715, %v602
      %v748 = vmul.f32 %v716, %v651
      %v749 = vmul.f32 %v717, %v604
      %v750 = vmul.f32 %v718, %v653
      %v751 = vmul.f32 %v719, 0.044715
      %v752 = vmul.f32 %v720, 0.044715
      %v753 = vmul.f32 %v721, 0.044715
      %v754 = vmul.f32 %v722, 0.044715
      %v755 = vmul.f32 %v723, 0.044715
      %v756 = vmul.f32 %v724, 0.044715
      %v757 = vmul.f32 %v725, 0.044715
      %v758 = vmul.f32 %v726, 0.044715
      %v759 = vmul.f32 %v727, 0.044715
      %v760 = vmul.f32 %v728, 0.044715
      %v761 = vmul.f32 %v729, 0.044715
      %v762 = vmul.f32 %v730, 0.044715
      %v763 = vmul.f32 %v731, 0.044715
      %v764 = vmul.f32 %v732, 0.044715
      %v765 = vmul.f32 %v733, 0.044715
      %v766 = vmul.f32 %v734, 0.044715
      %v767 = vmul.f32 %v735, 0.044715
      %v768 = vmul.f32 %v736, 0.044715
      %v769 = vmul.f32 %v737, 0.044715
      %v770 = vmul.f32 %v738, 0.044715
      %v771 = vmul.f32 %v739, 0.044715
      %v772 = vmul.f32 %v740, 0.044715
      %v773 = vmul.f32 %v741, 0.044715
      %v774 = vmul.f32 %v742, 0.044715
      %v775 = vmul.f32 %v743, 0.044715
      %v776 = vmul.f32 %v744, 0.044715
      %v777 = vmul.f32 %v745, 0.044715
      %v778 = vmul.f32 %v746, 0.044715
      %v779 = vmul.f32 %v747, 0.044715
      %v780 = vmul.f32 %v748, 0.044715
      %v781 = vmul.f32 %v749, 0.044715
      %v782 = vmul.f32 %v750, 0.044715
      %v783 = vadd.f32 %v567, %v751
      %v784 = vadd.f32 %v616, %v752
      %v785 = vadd.f32 %v569, %v753
      %v786 = vadd.f32 %v618, %v754
      %v787 = vadd.f32 %v572, %v755
      %v788 = vadd.f32 %v621, %v756
      %v789 = vadd.f32 %v574, %v757
      %v790 = vadd.f32 %v623, %v758
      %v791 = vadd.f32 %v577, %v759
      %v792 = vadd.f32 %v626, %v760
      %v793 = vadd.f32 %v579, %v761
      %v794 = vadd.f32 %v628, %v762
      %v795 = vadd.f32 %v582, %v763
      %v796 = vadd.f32 %v631, %v764
      %v797 = vadd.f32 %v584, %v765
      %v798 = vadd.f32 %v633, %v766
      %v799 = vadd.f32 %v587, %v767
      %v800 = vadd.f32 %v636, %v768
      %v801 = vadd.f32 %v589, %v769
      %v802 = vadd.f32 %v638, %v770
      %v803 = vadd.f32 %v592, %v771
      %v804 = vadd.f32 %v641, %v772
      %v805 = vadd.f32 %v594, %v773
      %v806 = vadd.f32 %v643, %v774
      %v807 = vadd.f32 %v597, %v775
      %v808 = vadd.f32 %v646, %v776
      %v809 = vadd.f32 %v599, %v777
      %v810 = vadd.f32 %v648, %v778
      %v811 = vadd.f32 %v602, %v779
      %v812 = vadd.f32 %v651, %v780
      %v813 = vadd.f32 %v604, %v781
      %v814 = vadd.f32 %v653, %v782
      %v815 = vmul.f32 %v783, 0.7978846
      %v816 = vmul.f32 %v784, 0.7978846
      %v817 = vmul.f32 %v785, 0.7978846
      %v818 = vmul.f32 %v786, 0.7978846
      %v819 = vmul.f32 %v787, 0.7978846
      %v820 = vmul.f32 %v788, 0.7978846
      %v821 = vmul.f32 %v789, 0.7978846
      %v822 = vmul.f32 %v790, 0.7978846
      %v823 = vmul.f32 %v791, 0.7978846
      %v824 = vmul.f32 %v792, 0.7978846
      %v825 = vmul.f32 %v793, 0.7978846
      %v826 = vmul.f32 %v794, 0.7978846
      %v827 = vmul.f32 %v795, 0.7978846
      %v828 = vmul.f32 %v796, 0.7978846
      %v829 = vmul.f32 %v797, 0.7978846
      %v830 = vmul.f32 %v798, 0.7978846
      %v831 = vmul.f32 %v799, 0.7978846
      %v832 = vmul.f32 %v800, 0.7978846
      %v833 = vmul.f32 %v801, 0.7978846
      %v834 = vmul.f32 %v802, 0.7978846
      %v835 = vmul.f32 %v803, 0.7978846
      %v836 = vmul.f32 %v804, 0.7978846
      %v837 = vmul.f32 %v805, 0.7978846
      %v838 = vmul.f32 %v806, 0.7978846
      %v839 = vmul.f32 %v807, 0.7978846
      %v840 = vmul.f32 %v808, 0.7978846
      %v841 = vmul.f32 %v809, 0.7978846
      %v842 = vmul.f32 %v810, 0.7978846
      %v843 = vmul.f32 %v811, 0.7978846
      %v844 = vmul.f32 %v812, 0.7978846
      %v845 = vmul.f32 %v813, 0.7978846
      %v846 = vmul.f32 %v814, 0.7978846
      %v847 = vtanh.pop %v815
      %v848 = vtanh.pop %v816
      %v849 = vtanh.pop %v817
      %v850 = vtanh.pop %v818
      %v851 = vtanh.pop %v819
      %v852 = vtanh.pop %v820
      %v853 = vtanh.pop %v821
      %v854 = vtanh.pop %v822
      %v855 = vtanh.pop %v823
      %v856 = vtanh.pop %v824
      %v857 = vtanh.pop %v825
      %v858 = vtanh.pop %v826
      %v859 = vtanh.pop %v827
      %v860 = vtanh.pop %v828
      %v861 = vtanh.pop %v829
      %v862 = vtanh.pop %v830
      %v863 = vtanh.pop %v831
      %v864 = vtanh.pop %v832
      %v865 = vtanh.pop %v833
      %v866 = vtanh.pop %v834
      %v867 = vtanh.pop %v835
      %v868 = vtanh.pop %v836
      %v869 = vtanh.pop %v837
      %v870 = vtanh.pop %v838
      %v871 = vtanh.pop %v839
      %v872 = vtanh.pop %v840
      %v873 = vtanh.pop %v841
      %v874 = vtanh.pop %v842
      %v875 = vtanh.pop %v843
      %v876 = vtanh.pop %v844
      %v877 = vtanh.pop %v845
      %v878 = vtanh.pop %v846
      %v879 = vadd.f32 %v847, 1.0
      %v880 = vadd.f32 %v848, 1.0
      %v881 = vadd.f32 %v849, 1.0
      %v882 = vadd.f32 %v850, 1.0
      %v883 = vadd.f32 %v851, 1.0
      %v884 = vadd.f32 %v852, 1.0
      %v885 = vadd.f32 %v853, 1.0
      %v886 = vadd.f32 %v854, 1.0
      %v887 = vadd.f32 %v855, 1.0
      %v888 = vadd.f32 %v856, 1.0
      %v889 = vadd.f32 %v857, 1.0
      %v890 = vadd.f32 %v858, 1.0
      %v891 = vadd.f32 %v859, 1.0
      %v892 = vadd.f32 %v860, 1.0
      %v893 = vadd.f32 %v861, 1.0
      %v894 = vadd.f32 %v862, 1.0
      %v895 = vadd.f32 %v863, 1.0
      %v896 = vadd.f32 %v864, 1.0
      %v897 = vadd.f32 %v865, 1.0
      %v898 = vadd.f32 %v866, 1.0
      %v899 = vadd.f32 %v867, 1.0
      %v900 = vadd.f32 %v868, 1.0
      %v901 = vadd.f32 %v869, 1.0
      %v902 = vadd.f32 %v870, 1.0
      %v903 = vadd.f32 %v871, 1.0
      %v904 = vadd.f32 %v872, 1.0
      %v905 = vadd.f32 %v873, 1.0
      %v906 = vadd.f32 %v874, 1.0
      %v907 = vadd.f32 %v875, 1.0
      %v908 = vadd.f32 %v876, 1.0
      %v909 = vadd.f32 %v877, 1.0
      %v910 = vadd.f32 %v878, 1.0
      %v911 = vmul.f32 %v655, %v879
      %v912 = vmul.f32 %v656, %v880
      %v913 = vmul.f32 %v657, %v881
      %v914 = vmul.f32 %v658, %v882
      %v915 = vmul.f32 %v659, %v883
      %v916 = vmul.f32 %v660, %v884
      %v917 = vmul.f32 %v661, %v885
      %v918 = vmul.f32 %v662, %v886
      %v919 = vmul.f32 %v663, %v887
      %v920 = vmul.f32 %v664, %v888
      %v921 = vmul.f32 %v665, %v889
      %v922 = vmul.f32 %v666, %v890
      %v923 = vmul.f32 %v667, %v891
      %v924 = vmul.f32 %v668, %v892
      %v925 = vmul.f32 %v669, %v893
      %v926 = vmul.f32 %v670, %v894
      %v927 = vmul.f32 %v671, %v895
      %v928 = vmul.f32 %v672, %v896
      %v929 = vmul.f32 %v673, %v897
      %v930 = vmul.f32 %v674, %v898
      %v931 = vmul.f32 %v675, %v899
      %v932 = vmul.f32 %v676, %v900
      %v933 = vmul.f32 %v677, %v901
      %v934 = vmul.f32 %v678, %v902
      %v935 = vmul.f32 %v679, %v903
      %v936 = vmul.f32 %v680, %v904
      %v937 = vmul.f32 %v681, %v905
      %v938 = vmul.f32 %v682, %v906
      %v939 = vmul.f32 %v683, %v907
      %v940 = vmul.f32 %v684, %v908
      %v941 = vmul.f32 %v685, %v909
      %v942 = vmul.f32 %v686, %v910
      %v943 = vpack.c.bf16 %v913, %v911
      %v944 = vpack.c.bf16 %v914, %v912
      %v945 = vpack.c.bf16 %v917, %v915
      %v946 = vpack.c.bf16 %v918, %v916
      %v947 = vpack.c.bf16 %v921, %v919
      %v948 = vpack.c.bf16 %v922, %v920
      %v949 = vpack.c.bf16 %v925, %v923
      %v950 = vpack.c.bf16 %v926, %v924
      %v951 = vpack.c.bf16 %v929, %v927
      %v952 = vpack.c.bf16 %v930, %v928
      %v953 = vpack.c.bf16 %v933, %v931
      %v954 = vpack.c.bf16 %v934, %v932
      %v955 = vpack.c.bf16 %v937, %v935
      %v956 = vpack.c.bf16 %v938, %v936
      %v957 = vpack.c.bf16 %v941, %v939
      %v958 = vpack.c.bf16 %v942, %v940
      %v959 = vld [vmem:[%s5] sm:$0xf]
      %v960 = vld [vmem:[%s5 + $0x4] sm:$0xf]
      %v961 = vld [vmem:[%s5 + $0x8] sm:$0xf]
      %v962 = vld [vmem:[%s5 + $0xc] sm:$0xf]
      %v963 = vld [vmem:[%s5 + $0x10] sm:$0xf]
      %v964 = vld [vmem:[%s5 + $0x14] sm:$0xf]
      %v965 = vld [vmem:[%s5 + $0x18] sm:$0xf]
      %v966 = vld [vmem:[%s5 + $0x1c] sm:$0xf]
      %v967 = vld [vmem:[%s5 + $0x20] sm:$0xf]
      %v968 = vld [vmem:[%s5 + $0x24] sm:$0xf]
      %v969 = vld [vmem:[%s5 + $0x28] sm:$0xf]
      %v970 = vld [vmem:[%s5 + $0x2c] sm:$0xf]
      %v971 = vld [vmem:[%s5 + $0x30] sm:$0xf]
      %v972 = vld [vmem:[%s5 + $0x34] sm:$0xf]
      %v973 = vld [vmem:[%s5 + $0x38] sm:$0xf]
      %v974 = vld [vmem:[%s5 + $0x3c] sm:$0xf]
      %v975 = vld [vmem:[%s5 + $0x40] sm:$0xf]
      %v976 = vld [vmem:[%s5 + $0x44] sm:$0xf]
      %v977 = vld [vmem:[%s5 + $0x48] sm:$0xf]
      %v978 = vld [vmem:[%s5 + $0x4c] sm:$0xf]
      %v979 = vld [vmem:[%s5 + $0x50] sm:$0xf]
      %v980 = vld [vmem:[%s5 + $0x54] sm:$0xf]
      %v981 = vld [vmem:[%s5 + $0x58] sm:$0xf]
      %v982 = vld [vmem:[%s5 + $0x5c] sm:$0xf]
      %v983 = vld [vmem:[%s5 + $0x60] sm:$0xf]
      %v984 = vld [vmem:[%s5 + $0x64] sm:$0xf]
      %v985 = vld [vmem:[%s5 + $0x68] sm:$0xf]
      %v986 = vld [vmem:[%s5 + $0x6c] sm:$0xf]
      %v987 = vld [vmem:[%s5 + $0x70] sm:$0xf]
      %v988 = vld [vmem:[%s5 + $0x74] sm:$0xf]
      %v989 = vld [vmem:[%s5 + $0x78] sm:$0xf]
      %v990 = vld [vmem:[%s5 + $0x7c] sm:$0xf]
      %v991 = vld [vmem:[%s6] sm:$0x1]
      %v993 = vperm.slane %v991, 0
      %v1027 = vunpack.c.l.b16 %v959
      %v1028 = vunpack.c.l.b16 %v960
      %v1029 = vunpack.c.l.b16 %v961
      %v1030 = vunpack.c.l.b16 %v962
      %v1031 = vunpack.c.l.b16 %v963
      %v1032 = vunpack.c.l.b16 %v964
      %v1033 = vunpack.c.l.b16 %v965
      %v1034 = vunpack.c.l.b16 %v966
      %v1035 = vunpack.c.l.b16 %v967
      %v1036 = vunpack.c.l.b16 %v968
      %v1037 = vunpack.c.l.b16 %v969
      %v1038 = vunpack.c.l.b16 %v970
      %v1039 = vunpack.c.l.b16 %v971
      %v1040 = vunpack.c.l.b16 %v972
      %v1041 = vunpack.c.l.b16 %v973
      %v1042 = vunpack.c.l.b16 %v974
      %v1043 = vunpack.c.l.b16 %v975
      %v1044 = vunpack.c.l.b16 %v976
      %v1045 = vunpack.c.l.b16 %v977
      %v1046 = vunpack.c.l.b16 %v978
      %v1047 = vunpack.c.l.b16 %v979
      %v1048 = vunpack.c.l.b16 %v980
      %v1049 = vunpack.c.l.b16 %v981
      %v1050 = vunpack.c.l.b16 %v982
      %v1051 = vunpack.c.l.b16 %v983
      %v1052 = vunpack.c.l.b16 %v984
      %v1053 = vunpack.c.l.b16 %v985
      %v1054 = vunpack.c.l.b16 %v986
      %v1055 = vunpack.c.l.b16 %v987
      %v1056 = vunpack.c.l.b16 %v988
      %v1057 = vunpack.c.l.b16 %v989
      %v1058 = vunpack.c.l.b16 %v990
      %v1059 = vpack.c.b16 %v1028, %v1027
      %v1060 = vpack.c.b16 %v1030, %v1029
      %v1061 = vpack.c.b16 %v1032, %v1031
      %v1062 = vpack.c.b16 %v1034, %v1033
      %v1063 = vpack.c.b16 %v1036, %v1035
      %v1064 = vpack.c.b16 %v1038, %v1037
      %v1065 = vpack.c.b16 %v1040, %v1039
      %v1066 = vpack.c.b16 %v1042, %v1041
      %v1067 = vpack.c.b16 %v1044, %v1043
      %v1068 = vpack.c.b16 %v1046, %v1045
      %v1069 = vpack.c.b16 %v1048, %v1047
      %v1070 = vpack.c.b16 %v1050, %v1049
      %v1071 = vpack.c.b16 %v1052, %v1051
      %v1072 = vpack.c.b16 %v1054, %v1053
      %v1073 = vpack.c.b16 %v1056, %v1055
      %v1074 = vpack.c.b16 %v1058, %v1057
      %1091 = vmatpush.bf16.msra.mxu0 %v1066
      %1092 = vmatpush.bf16.msra.mxu0 %v1065
      %1093 = vmatpush.bf16.msra.mxu0 %v1064
      %1094 = vmatpush.bf16.msra.mxu0 %v1063
      %1095 = vmatpush.bf16.msra.mxu0 %v1062
      %1096 = vmatpush.bf16.msra.mxu0 %v1061
      %1097 = vmatpush.bf16.msra.mxu0 %v1060
      %1098 = vmatpush.bf16.msra.mxu0 %v1059
      %1099 = vmatmul.bf16.gmra.mxu0 %v943
      %v1100 = vpop.f32.mrf.mxu0
      %v1101 = vadd.f32 %v993, %v1100
      %v1102 = vpop.f32.mrf.mxu0
      %v1103 = vadd.f32 %v993, %v1102
      %1104 = vmatmul.bf16.gmra.mxu0 %v945
      %v1105 = vpop.f32.mrf.mxu0
      %v1106 = vadd.f32 %v993, %v1105
      %v1107 = vpop.f32.mrf.mxu0
      %v1108 = vadd.f32 %v993, %v1107
      %1109 = vmatmul.bf16.gmra.mxu0 %v947
      %v1110 = vpop.f32.mrf.mxu0
      %v1111 = vadd.f32 %v993, %v1110
      %v1112 = vpop.f32.mrf.mxu0
      %v1113 = vadd.f32 %v993, %v1112
      %1114 = vmatmul.bf16.gmra.mxu0 %v949
      %v1115 = vpop.f32.mrf.mxu0
      %v1116 = vadd.f32 %v993, %v1115
      %v1117 = vpop.f32.mrf.mxu0
      %v1118 = vadd.f32 %v993, %v1117
      %1119 = vmatmul.bf16.gmra.mxu0 %v951
      %v1120 = vpop.f32.mrf.mxu0
      %v1121 = vadd.f32 %v993, %v1120
      %v1122 = vpop.f32.mrf.mxu0
      %v1123 = vadd.f32 %v993, %v1122
      %1124 = vmatmul.bf16.gmra.mxu0 %v953
      %v1125 = vpop.f32.mrf.mxu0
      %v1126 = vadd.f32 %v993, %v1125
      %v1127 = vpop.f32.mrf.mxu0
      %v1128 = vadd.f32 %v993, %v1127
      %1129 = vmatmul.bf16.gmra.mxu0 %v955
      %v1130 = vpop.f32.mrf.mxu0
      %v1131 = vadd.f32 %v993, %v1130
      %v1132 = vpop.f32.mrf.mxu0
      %v1133 = vadd.f32 %v993, %v1132
      %1134 = vmatmul.bf16.gmra.mxu0 %v957
      %v1135 = vpop.f32.mrf.mxu0
      %v1136 = vadd.f32 %v993, %v1135
      %v1137 = vpop.f32.mrf.mxu0
      %v1138 = vadd.f32 %v993, %v1137
      %1139 = vdwg.mxu0
      %1140 = vmatpush.bf16.msra.mxu0 %v1074
      %1141 = vmatpush.bf16.msra.mxu0 %v1073
      %1142 = vmatpush.bf16.msra.mxu0 %v1072
      %1143 = vmatpush.bf16.msra.mxu0 %v1071
      %1144 = vmatpush.bf16.msra.mxu0 %v1070
      %1145 = vmatpush.bf16.msra.mxu0 %v1069
      %1146 = vmatpush.bf16.msra.mxu0 %v1068
      %1147 = vmatpush.bf16.msra.mxu0 %v1067
      %1148 = vmatmul.bf16.gmra.mxu0 %v944
      %v1149 = vpop.f32.mrf.mxu0
      %v1150 = vadd.f32 %v1101, %v1149
      %v1151 = vpop.f32.mrf.mxu0
      %v1152 = vadd.f32 %v1103, %v1151
      %1153 = vmatmul.bf16.gmra.mxu0 %v946
      %v1154 = vpop.f32.mrf.mxu0
      %v1155 = vadd.f32 %v1106, %v1154
      %v1156 = vpop.f32.mrf.mxu0
      %v1157 = vadd.f32 %v1108, %v1156
      %1158 = vmatmul.bf16.gmra.mxu0 %v948
      %v1159 = vpop.f32.mrf.mxu0
      %v1160 = vadd.f32 %v1111, %v1159
      %v1161 = vpop.f32.mrf.mxu0
      %v1162 = vadd.f32 %v1113, %v1161
      %1163 = vmatmul.bf16.gmra.mxu0 %v950
      %v1164 = vpop.f32.mrf.mxu0
      %v1165 = vadd.f32 %v1116, %v1164
      %v1166 = vpop.f32.mrf.mxu0
      %v1167 = vadd.f32 %v1118, %v1166
      %1168 = vmatmul.bf16.gmra.mxu0 %v952
      %v1169 = vpop.f32.mrf.mxu0
      %v1170 = vadd.f32 %v1121, %v1169
      %v1171 = vpop.f32.mrf.mxu0
      %v1172 = vadd.f32 %v1123, %v1171
      %1173 = vmatmul.bf16.gmra.mxu0 %v954
      %v1174 = vpop.f32.mrf.mxu0
      %v1175 = vadd.f32 %v1126, %v1174
      %v1176 = vpop.f32.mrf.mxu0
      %v1177 = vadd.f32 %v1128, %v1176
      %1178 = vmatmul.bf16.gmra.mxu0 %v956
      %v1179 = vpop.f32.mrf.mxu0
      %v1180 = vadd.f32 %v1131, %v1179
      %v1181 = vpop.f32.mrf.mxu0
      %v1182 = vadd.f32 %v1133, %v1181
      %1183 = vmatmul.bf16.gmra.mxu0 %v958
      %v1184 = vpop.f32.mrf.mxu0
      %v1185 = vadd.f32 %v1136, %v1184
      %v1186 = vpop.f32.mrf.mxu0
      %v1187 = vadd.f32 %v1138, %v1186
      %1188 = vdwg.mxu0
      %v1189 = vmul.f32 %v1150, 0.5
      %v1190 = vmul.f32 %v1152, 0.5
      %v1191 = vmul.f32 %v1155, 0.5
      %v1192 = vmul.f32 %v1157, 0.5
      %v1193 = vmul.f32 %v1160, 0.5
      %v1194 = vmul.f32 %v1162, 0.5
      %v1195 = vmul.f32 %v1165, 0.5
      %v1196 = vmul.f32 %v1167, 0.5
      %v1197 = vmul.f32 %v1170, 0.5
      %v1198 = vmul.f32 %v1172, 0.5
      %v1199 = vmul.f32 %v1175, 0.5
      %v1200 = vmul.f32 %v1177, 0.5
      %v1201 = vmul.f32 %v1180, 0.5
      %v1202 = vmul.f32 %v1182, 0.5
      %v1203 = vmul.f32 %v1185, 0.5
      %v1204 = vmul.f32 %v1187, 0.5
      %v1205 = vmul.f32 %v1150, %v1150
      %v1206 = vmul.f32 %v1152, %v1152
      %v1207 = vmul.f32 %v1155, %v1155
      %v1208 = vmul.f32 %v1157, %v1157
      %v1209 = vmul.f32 %v1160, %v1160
      %v1210 = vmul.f32 %v1162, %v1162
      %v1211 = vmul.f32 %v1165, %v1165
      %v1212 = vmul.f32 %v1167, %v1167
      %v1213 = vmul.f32 %v1170, %v1170
      %v1214 = vmul.f32 %v1172, %v1172
      %v1215 = vmul.f32 %v1175, %v1175
      %v1216 = vmul.f32 %v1177, %v1177
      %v1217 = vmul.f32 %v1180, %v1180
      %v1218 = vmul.f32 %v1182, %v1182
      %v1219 = vmul.f32 %v1185, %v1185
      %v1220 = vmul.f32 %v1187, %v1187
      %v1221 = vmul.f32 %v1205, %v1150
      %v1222 = vmul.f32 %v1206, %v1152
      %v1223 = vmul.f32 %v1207, %v1155
      %v1224 = vmul.f32 %v1208, %v1157
      %v1225 = vmul.f32 %v1209, %v1160
      %v1226 = vmul.f32 %v1210, %v1162
      %v1227 = vmul.f32 %v1211, %v1165
      %v1228 = vmul.f32 %v1212, %v1167
      %v1229 = vmul.f32 %v1213, %v1170
      %v1230 = vmul.f32 %v1214, %v1172
      %v1231 = vmul.f32 %v1215, %v1175
      %v1232 = vmul.f32 %v1216, %v1177
      %v1233 = vmul.f32 %v1217, %v1180
      %v1234 = vmul.f32 %v1218, %v1182
      %v1235 = vmul.f32 %v1219, %v1185
      %v1236 = vmul.f32 %v1220, %v1187
      %v1237 = vmul.f32 %v1221, 0.044715
      %v1238 = vmul.f32 %v1222, 0.044715
      %v1239 = vmul.f32 %v1223, 0.044715
      %v1240 = vmul.f32 %v1224, 0.044715
      %v1241 = vmul.f32 %v1225, 0.044715
      %v1242 = vmul.f32 %v1226, 0.044715
      %v1243 = vmul.f32 %v1227, 0.044715
      %v1244 = vmul.f32 %v1228, 0.044715
      %v1245 = vmul.f32 %v1229, 0.044715
      %v1246 = vmul.f32 %v1230, 0.044715
      %v1247 = vmul.f32 %v1231, 0.044715
      %v1248 = vmul.f32 %v1232, 0.044715
      %v1249 = vmul.f32 %v1233, 0.044715
      %v1250 = vmul.f32 %v1234, 0.044715
      %v1251 = vmul.f32 %v1235, 0.044715
      %v1252 = vmul.f32 %v1236, 0.044715
      %v1253 = vadd.f32 %v1150, %v1237
      %v1254 = vadd.f32 %v1152, %v1238
      %v1255 = vadd.f32 %v1155, %v1239
      %v1256 = vadd.f32 %v1157, %v1240
      %v1257 = vadd.f32 %v1160, %v1241
      %v1258 = vadd.f32 %v1162, %v1242
      %v1259 = vadd.f32 %v1165, %v1243
      %v1260 = vadd.f32 %v1167, %v1244
      %v1261 = vadd.f32 %v1170, %v1245
      %v1262 = vadd.f32 %v1172, %v1246
      %v1263 = vadd.f32 %v1175, %v1247
      %v1264 = vadd.f32 %v1177, %v1248
      %v1265 = vadd.f32 %v1180, %v1249
      %v1266 = vadd.f32 %v1182, %v1250
      %v1267 = vadd.f32 %v1185, %v1251
      %v1268 = vadd.f32 %v1187, %v1252
      %v1269 = vmul.f32 %v1253, 0.7978846
      %v1270 = vmul.f32 %v1254, 0.7978846
      %v1271 = vmul.f32 %v1255, 0.7978846
      %v1272 = vmul.f32 %v1256, 0.7978846
      %v1273 = vmul.f32 %v1257, 0.7978846
      %v1274 = vmul.f32 %v1258, 0.7978846
      %v1275 = vmul.f32 %v1259, 0.7978846
      %v1276 = vmul.f32 %v1260, 0.7978846
      %v1277 = vmul.f32 %v1261, 0.7978846
      %v1278 = vmul.f32 %v1262, 0.7978846
      %v1279 = vmul.f32 %v1263, 0.7978846
      %v1280 = vmul.f32 %v1264, 0.7978846
      %v1281 = vmul.f32 %v1265, 0.7978846
      %v1282 = vmul.f32 %v1266, 0.7978846
      %v1283 = vmul.f32 %v1267, 0.7978846
      %v1284 = vmul.f32 %v1268, 0.7978846
      %v1285 = vtanh.pop %v1269
      %v1286 = vtanh.pop %v1270
      %v1287 = vtanh.pop %v1271
      %v1288 = vtanh.pop %v1272
      %v1289 = vtanh.pop %v1273
      %v1290 = vtanh.pop %v1274
      %v1291 = vtanh.pop %v1275
      %v1292 = vtanh.pop %v1276
      %v1293 = vtanh.pop %v1277
      %v1294 = vtanh.pop %v1278
      %v1295 = vtanh.pop %v1279
      %v1296 = vtanh.pop %v1280
      %v1297 = vtanh.pop %v1281
      %v1298 = vtanh.pop %v1282
      %v1299 = vtanh.pop %v1283
      %v1300 = vtanh.pop %v1284
      %v1301 = vadd.f32 %v1285, 1.0
      %v1302 = vadd.f32 %v1286, 1.0
      %v1303 = vadd.f32 %v1287, 1.0
      %v1304 = vadd.f32 %v1288, 1.0
      %v1305 = vadd.f32 %v1289, 1.0
      %v1306 = vadd.f32 %v1290, 1.0
      %v1307 = vadd.f32 %v1291, 1.0
      %v1308 = vadd.f32 %v1292, 1.0
      %v1309 = vadd.f32 %v1293, 1.0
      %v1310 = vadd.f32 %v1294, 1.0
      %v1311 = vadd.f32 %v1295, 1.0
      %v1312 = vadd.f32 %v1296, 1.0
      %v1313 = vadd.f32 %v1297, 1.0
      %v1314 = vadd.f32 %v1298, 1.0
      %v1315 = vadd.f32 %v1299, 1.0
      %v1316 = vadd.f32 %v1300, 1.0
      %v1317 = vmul.f32 %v1189, %v1301
      %v1318 = vmul.f32 %v1190, %v1302
      %v1319 = vmul.f32 %v1191, %v1303
      %v1320 = vmul.f32 %v1192, %v1304
      %v1321 = vmul.f32 %v1193, %v1305
      %v1322 = vmul.f32 %v1194, %v1306
      %v1323 = vmul.f32 %v1195, %v1307
      %v1324 = vmul.f32 %v1196, %v1308
      %v1325 = vmul.f32 %v1197, %v1309
      %v1326 = vmul.f32 %v1198, %v1310
      %v1327 = vmul.f32 %v1199, %v1311
      %v1328 = vmul.f32 %v1200, %v1312
      %v1329 = vmul.f32 %v1201, %v1313
      %v1330 = vmul.f32 %v1202, %v1314
      %v1331 = vmul.f32 %v1203, %v1315
      %v1332 = vmul.f32 %v1204, %v1316
      %v1333 = vpack.c.bf16 %v1318, %v1317
      %v1334 = vpack.c.bf16 %v1320, %v1319
      %v1335 = vpack.c.bf16 %v1322, %v1321
      %v1336 = vpack.c.bf16 %v1324, %v1323
      %v1337 = vpack.c.bf16 %v1326, %v1325
      %v1338 = vpack.c.bf16 %v1328, %v1327
      %v1339 = vpack.c.bf16 %v1330, %v1329
      %v1340 = vpack.c.bf16 %v1332, %v1331
      %v1341 = vld [vmem:[%s7] sm:$0xf]
      %v1342 = vld [vmem:[%s7 + $0x4] sm:$0xf]
      %v1343 = vld [vmem:[%s7 + $0x8] sm:$0xf]
      %v1344 = vld [vmem:[%s7 + $0xc] sm:$0xf]
      %v1345 = vld [vmem:[%s7 + $0x10] sm:$0xf]
      %v1346 = vld [vmem:[%s7 + $0x14] sm:$0xf]
      %v1347 = vld [vmem:[%s7 + $0x18] sm:$0xf]
      %v1348 = vld [vmem:[%s7 + $0x1c] sm:$0xf]
      %v1349 = vld [vmem:[%s7 + $0x20] sm:$0xf]
      %v1350 = vld [vmem:[%s7 + $0x24] sm:$0xf]
      %v1351 = vld [vmem:[%s7 + $0x28] sm:$0xf]
      %v1352 = vld [vmem:[%s7 + $0x2c] sm:$0xf]
      %v1353 = vld [vmem:[%s7 + $0x30] sm:$0xf]
      %v1354 = vld [vmem:[%s7 + $0x34] sm:$0xf]
      %v1355 = vld [vmem:[%s7 + $0x38] sm:$0xf]
      %v1356 = vld [vmem:[%s7 + $0x3c] sm:$0xf]
      %v1357 = vld [vmem:[%s8] sm:$0x1]
      %v1359 = vperm.slane %v1357, 0
      %v1377 = vunpack.c.l.b16 %v1341
      %v1378 = vunpack.c.l.b16 %v1342
      %v1379 = vunpack.c.l.b16 %v1343
      %v1380 = vunpack.c.l.b16 %v1344
      %v1381 = vunpack.c.l.b16 %v1345
      %v1382 = vunpack.c.l.b16 %v1346
      %v1383 = vunpack.c.l.b16 %v1347
      %v1384 = vunpack.c.l.b16 %v1348
      %v1385 = vunpack.c.l.b16 %v1349
      %v1386 = vunpack.c.l.b16 %v1350
      %v1387 = vunpack.c.l.b16 %v1351
      %v1388 = vunpack.c.l.b16 %v1352
      %v1389 = vunpack.c.l.b16 %v1353
      %v1390 = vunpack.c.l.b16 %v1354
      %v1391 = vunpack.c.l.b16 %v1355
      %v1392 = vunpack.c.l.b16 %v1356
      %v1393 = vpack.c.b16 %v1378, %v1377
      %v1394 = vpack.c.b16 %v1380, %v1379
      %v1395 = vpack.c.b16 %v1382, %v1381
      %v1396 = vpack.c.b16 %v1384, %v1383
      %v1397 = vpack.c.b16 %v1386, %v1385
      %v1398 = vpack.c.b16 %v1388, %v1387
      %v1399 = vpack.c.b16 %v1390, %v1389
      %v1400 = vpack.c.b16 %v1392, %v1391
      %1409 = vmatpush.bf16.msra.mxu0 %v1400
      %1410 = vmatpush.bf16.msra.mxu0 %v1399
      %1411 = vmatpush.bf16.msra.mxu0 %v1398
      %1412 = vmatpush.bf16.msra.mxu0 %v1397
      %1413 = vmatpush.bf16.msra.mxu0 %v1396
      %1414 = vmatpush.bf16.msra.mxu0 %v1395
      %1415 = vmatpush.bf16.msra.mxu0 %v1394
      %1416 = vmatpush.bf16.msra.mxu0 %v1393
      %1417 = vmatmul.bf16.gmra.mxu0 %v1333
      %v1418 = vpop.f32.mrf.mxu0
      %v1419 = vadd.f32 %v1359, %v1418
      %v1420 = vpop.f32.mrf.mxu0
      %v1421 = vadd.f32 %v1359, %v1420
      %1422 = vmatmul.bf16.gmra.mxu0 %v1334
      %v1423 = vpop.f32.mrf.mxu0
      %v1424 = vadd.f32 %v1359, %v1423
      %v1425 = vpop.f32.mrf.mxu0
      %v1426 = vadd.f32 %v1359, %v1425
      %1427 = vmatmul.bf16.gmra.mxu0 %v1335
      %v1428 = vpop.f32.mrf.mxu0
      %v1429 = vadd.f32 %v1359, %v1428
      %v1430 = vpop.f32.mrf.mxu0
      %v1431 = vadd.f32 %v1359, %v1430
      %1432 = vmatmul.bf16.gmra.mxu0 %v1336
      %v1433 = vpop.f32.mrf.mxu0
      %v1434 = vadd.f32 %v1359, %v1433
      %v1435 = vpop.f32.mrf.mxu0
      %v1436 = vadd.f32 %v1359, %v1435
      %1437 = vmatmul.bf16.gmra.mxu0 %v1337
      %v1438 = vpop.f32.mrf.mxu0
      %v1439 = vadd.f32 %v1359, %v1438
      %v1440 = vpop.f32.mrf.mxu0
      %v1441 = vadd.f32 %v1359, %v1440
      %1442 = vmatmul.bf16.gmra.mxu0 %v1338
      %v1443 = vpop.f32.mrf.mxu0
      %v1444 = vadd.f32 %v1359, %v1443
      %v1445 = vpop.f32.mrf.mxu0
      %v1446 = vadd.f32 %v1359, %v1445
      %1447 = vmatmul.bf16.gmra.mxu0 %v1339
      %v1448 = vpop.f32.mrf.mxu0
      %v1449 = vadd.f32 %v1359, %v1448
      %v1450 = vpop.f32.mrf.mxu0
      %v1451 = vadd.f32 %v1359, %v1450
      %1452 = vmatmul.bf16.gmra.mxu0 %v1340
      %v1453 = vpop.f32.mrf.mxu0
      %v1454 = vadd.f32 %v1359, %v1453
      %v1455 = vpop.f32.mrf.mxu0
      %v1456 = vadd.f32 %v1359, %v1455
      %1457 = vdwg.mxu0
      %v1458 = vmul.f32 %v1419, 0.5
      %v1459 = vmul.f32 %v1421, 0.5
      %v1460 = vmul.f32 %v1424, 0.5
      %v1461 = vmul.f32 %v1426, 0.5
      %v1462 = vmul.f32 %v1429, 0.5
      %v1463 = vmul.f32 %v1431, 0.5
      %v1464 = vmul.f32 %v1434, 0.5
      %v1465 = vmul.f32 %v1436, 0.5
      %v1466 = vmul.f32 %v1439, 0.5
      %v1467 = vmul.f32 %v1441, 0.5
      %v1468 = vmul.f32 %v1444, 0.5
      %v1469 = vmul.f32 %v1446, 0.5
      %v1470 = vmul.f32 %v1449, 0.5
      %v1471 = vmul.f32 %v1451, 0.5
      %v1472 = vmul.f32 %v1454, 0.5
      %v1473 = vmul.f32 %v1456, 0.5
      %v1474 = vmul.f32 %v1419, %v1419
      %v1475 = vmul.f32 %v1421, %v1421
      %v1476 = vmul.f32 %v1424, %v1424
      %v1477 = vmul.f32 %v1426, %v1426
      %v1478 = vmul.f32 %v1429, %v1429
      %v1479 = vmul.f32 %v1431, %v1431
      %v1480 = vmul.f32 %v1434, %v1434
      %v1481 = vmul.f32 %v1436, %v1436
      %v1482 = vmul.f32 %v1439, %v1439
      %v1483 = vmul.f32 %v1441, %v1441
      %v1484 = vmul.f32 %v1444, %v1444
      %v1485 = vmul.f32 %v1446, %v1446
      %v1486 = vmul.f32 %v1449, %v1449
      %v1487 = vmul.f32 %v1451, %v1451
      %v1488 = vmul.f32 %v1454, %v1454
      %v1489 = vmul.f32 %v1456, %v1456
      %v1490 = vmul.f32 %v1474, %v1419
      %v1491 = vmul.f32 %v1475, %v1421
      %v1492 = vmul.f32 %v1476, %v1424
      %v1493 = vmul.f32 %v1477, %v1426
      %v1494 = vmul.f32 %v1478, %v1429
      %v1495 = vmul.f32 %v1479, %v1431
      %v1496 = vmul.f32 %v1480, %v1434
      %v1497 = vmul.f32 %v1481, %v1436
      %v1498 = vmul.f32 %v1482, %v1439
      %v1499 = vmul.f32 %v1483, %v1441
      %v1500 = vmul.f32 %v1484, %v1444
      %v1501 = vmul.f32 %v1485, %v1446
      %v1502 = vmul.f32 %v1486, %v1449
      %v1503 = vmul.f32 %v1487, %v1451
      %v1504 = vmul.f32 %v1488, %v1454
      %v1505 = vmul.f32 %v1489, %v1456
      %v1506 = vmul.f32 %v1490, 0.044715
      %v1507 = vmul.f32 %v1491, 0.044715
      %v1508 = vmul.f32 %v1492, 0.044715
      %v1509 = vmul.f32 %v1493, 0.044715
      %v1510 = vmul.f32 %v1494, 0.044715
      %v1511 = vmul.f32 %v1495, 0.044715
      %v1512 = vmul.f32 %v1496, 0.044715
      %v1513 = vmul.f32 %v1497, 0.044715
      %v1514 = vmul.f32 %v1498, 0.044715
      %v1515 = vmul.f32 %v1499, 0.044715
      %v1516 = vmul.f32 %v1500, 0.044715
      %v1517 = vmul.f32 %v1501, 0.044715
      %v1518 = vmul.f32 %v1502, 0.044715
      %v1519 = vmul.f32 %v1503, 0.044715
      %v1520 = vmul.f32 %v1504, 0.044715
      %v1521 = vmul.f32 %v1505, 0.044715
      %v1522 = vadd.f32 %v1419, %v1506
      %v1523 = vadd.f32 %v1421, %v1507
      %v1524 = vadd.f32 %v1424, %v1508
      %v1525 = vadd.f32 %v1426, %v1509
      %v1526 = vadd.f32 %v1429, %v1510
      %v1527 = vadd.f32 %v1431, %v1511
      %v1528 = vadd.f32 %v1434, %v1512
      %v1529 = vadd.f32 %v1436, %v1513
      %v1530 = vadd.f32 %v1439, %v1514
      %v1531 = vadd.f32 %v1441, %v1515
      %v1532 = vadd.f32 %v1444, %v1516
      %v1533 = vadd.f32 %v1446, %v1517
      %v1534 = vadd.f32 %v1449, %v1518
      %v1535 = vadd.f32 %v1451, %v1519
      %v1536 = vadd.f32 %v1454, %v1520
      %v1537 = vadd.f32 %v1456, %v1521
      %v1538 = vmul.f32 %v1522, 0.7978846
      %v1539 = vmul.f32 %v1523, 0.7978846
      %v1540 = vmul.f32 %v1524, 0.7978846
      %v1541 = vmul.f32 %v1525, 0.7978846
      %v1542 = vmul.f32 %v1526, 0.7978846
      %v1543 = vmul.f32 %v1527, 0.7978846
      %v1544 = vmul.f32 %v1528, 0.7978846
      %v1545 = vmul.f32 %v1529, 0.7978846
      %v1546 = vmul.f32 %v1530, 0.7978846
      %v1547 = vmul.f32 %v1531, 0.7978846
      %v1548 = vmul.f32 %v1532, 0.7978846
      %v1549 = vmul.f32 %v1533, 0.7978846
      %v1550 = vmul.f32 %v1534, 0.7978846
      %v1551 = vmul.f32 %v1535, 0.7978846
      %v1552 = vmul.f32 %v1536, 0.7978846
      %v1553 = vmul.f32 %v1537, 0.7978846
      %v1554 = vtanh.pop %v1538
      %v1555 = vtanh.pop %v1539
      %v1556 = vtanh.pop %v1540
      %v1557 = vtanh.pop %v1541
      %v1558 = vtanh.pop %v1542
      %v1559 = vtanh.pop %v1543
      %v1560 = vtanh.pop %v1544
      %v1561 = vtanh.pop %v1545
      %v1562 = vtanh.pop %v1546
      %v1563 = vtanh.pop %v1547
      %v1564 = vtanh.pop %v1548
      %v1565 = vtanh.pop %v1549
      %v1566 = vtanh.pop %v1550
      %v1567 = vtanh.pop %v1551
      %v1568 = vtanh.pop %v1552
      %v1569 = vtanh.pop %v1553
      %v1570 = vadd.f32 %v1554, 1.0
      %v1571 = vadd.f32 %v1555, 1.0
      %v1572 = vadd.f32 %v1556, 1.0
      %v1573 = vadd.f32 %v1557, 1.0
      %v1574 = vadd.f32 %v1558, 1.0
      %v1575 = vadd.f32 %v1559, 1.0
      %v1576 = vadd.f32 %v1560, 1.0
      %v1577 = vadd.f32 %v1561, 1.0
      %v1578 = vadd.f32 %v1562, 1.0
      %v1579 = vadd.f32 %v1563, 1.0
      %v1580 = vadd.f32 %v1564, 1.0
      %v1581 = vadd.f32 %v1565, 1.0
      %v1582 = vadd.f32 %v1566, 1.0
      %v1583 = vadd.f32 %v1567, 1.0
      %v1584 = vadd.f32 %v1568, 1.0
      %v1585 = vadd.f32 %v1569, 1.0
      %v1586 = vmul.f32 %v1458, %v1570
      %v1587 = vmul.f32 %v1459, %v1571
      %v1588 = vmul.f32 %v1460, %v1572
      %v1589 = vmul.f32 %v1461, %v1573
      %v1590 = vmul.f32 %v1462, %v1574
      %v1591 = vmul.f32 %v1463, %v1575
      %v1592 = vmul.f32 %v1464, %v1576
      %v1593 = vmul.f32 %v1465, %v1577
      %v1594 = vmul.f32 %v1466, %v1578
      %v1595 = vmul.f32 %v1467, %v1579
      %v1596 = vmul.f32 %v1468, %v1580
      %v1597 = vmul.f32 %v1469, %v1581
      %v1598 = vmul.f32 %v1470, %v1582
      %v1599 = vmul.f32 %v1471, %v1583
      %v1600 = vmul.f32 %v1472, %v1584
      %v1601 = vmul.f32 %v1473, %v1585
      %v1602 = vld [vmem:[%s370] sm:$0xff]
      %v1603 = vld [vmem:[%s370 + $0x8] sm:$0xff]
      %v1604 = vld [vmem:[%s370 + $0x10] sm:$0xff]
      %v1605 = vld [vmem:[%s370 + $0x18] sm:$0xff]
      %v1606 = vld [vmem:[%s370 + $0x20] sm:$0xff]
      %v1607 = vld [vmem:[%s370 + $0x28] sm:$0xff]
      %v1608 = vld [vmem:[%s370 + $0x30] sm:$0xff]
      %v1609 = vld [vmem:[%s370 + $0x38] sm:$0xff]
      %v1610 = vld [vmem:[%s370 + $0x40] sm:$0xff]
      %v1611 = vld [vmem:[%s370 + $0x48] sm:$0xff]
      %v1612 = vld [vmem:[%s370 + $0x50] sm:$0xff]
      %v1613 = vld [vmem:[%s370 + $0x58] sm:$0xff]
      %v1614 = vld [vmem:[%s370 + $0x60] sm:$0xff]
      %v1615 = vld [vmem:[%s370 + $0x68] sm:$0xff]
      %v1616 = vld [vmem:[%s370 + $0x70] sm:$0xff]
      %v1617 = vld [vmem:[%s370 + $0x78] sm:$0xff]
      %1619 = vset.pattern.permute.xlu0 0
      %1620 = vperm.xlu0 %1619, %v1602
      %v1621 = vpop.permute.xlu0 %1620
      %1624 = vset.pattern.permute.xlu0 0
      %1625 = vperm.xlu0 %1624, %v1603
      %v1626 = vpop.permute.xlu0 %1625
      %1629 = vset.pattern.permute.xlu0 0
      %1630 = vperm.xlu0 %1629, %v1604
      %v1631 = vpop.permute.xlu0 %1630
      %1634 = vset.pattern.permute.xlu0 0
      %1635 = vperm.xlu0 %1634, %v1605
      %v1636 = vpop.permute.xlu0 %1635
      %1639 = vset.pattern.permute.xlu0 0
      %1640 = vperm.xlu0 %1639, %v1606
      %v1641 = vpop.permute.xlu0 %1640
      %1644 = vset.pattern.permute.xlu0 0
      %1645 = vperm.xlu0 %1644, %v1607
      %v1646 = vpop.permute.xlu0 %1645
      %1649 = vset.pattern.permute.xlu0 0
      %1650 = vperm.xlu0 %1649, %v1608
      %v1651 = vpop.permute.xlu0 %1650
      %1654 = vset.pattern.permute.xlu0 0
      %1655 = vperm.xlu0 %1654, %v1609
      %v1656 = vpop.permute.xlu0 %1655
      %1659 = vset.pattern.permute.xlu0 0
      %1660 = vperm.xlu0 %1659, %v1610
      %v1661 = vpop.permute.xlu0 %1660
      %1664 = vset.pattern.permute.xlu0 0
      %1665 = vperm.xlu0 %1664, %v1611
      %v1666 = vpop.permute.xlu0 %1665
      %1669 = vset.pattern.permute.xlu0 0
      %1670 = vperm.xlu0 %1669, %v1612
      %v1671 = vpop.permute.xlu0 %1670
      %1674 = vset.pattern.permute.xlu0 0
      %1675 = vperm.xlu0 %1674, %v1613
      %v1676 = vpop.permute.xlu0 %1675
      %1679 = vset.pattern.permute.xlu0 0
      %1680 = vperm.xlu0 %1679, %v1614
      %v1681 = vpop.permute.xlu0 %1680
      %1684 = vset.pattern.permute.xlu0 0
      %1685 = vperm.xlu0 %1684, %v1615
      %v1686 = vpop.permute.xlu0 %1685
      %1689 = vset.pattern.permute.xlu0 0
      %1690 = vperm.xlu0 %1689, %v1616
      %v1691 = vpop.permute.xlu0 %1690
      %1694 = vset.pattern.permute.xlu0 0
      %1695 = vperm.xlu0 %1694, %v1617
      %v1696 = vpop.permute.xlu0 %1695
      %v1698 = vadd.f32 %v1586, %v1621
      %v1699 = vadd.f32 %v1587, %v1626
      %v1700 = vadd.f32 %v1588, %v1631
      %v1701 = vadd.f32 %v1589, %v1636
      %v1702 = vadd.f32 %v1590, %v1641
      %v1703 = vadd.f32 %v1591, %v1646
      %v1704 = vadd.f32 %v1592, %v1651
      %v1705 = vadd.f32 %v1593, %v1656
      %v1706 = vadd.f32 %v1594, %v1661
      %v1707 = vadd.f32 %v1595, %v1666
      %v1708 = vadd.f32 %v1596, %v1671
      %v1709 = vadd.f32 %v1597, %v1676
      %v1710 = vadd.f32 %v1598, %v1681
      %v1711 = vadd.f32 %v1599, %v1686
      %v1712 = vadd.f32 %v1600, %v1691
      %v1713 = vadd.f32 %v1601, %v1696
      %vm1714 = vcmask 523264
      %v1715 = vsel %vm1714, %v1698, -inf
      %v1716 = vrot.slane %v1715, 4
      %v1717 = vmax.f32 %v1715, %v1716
      %v1718 = vrot.slane %v1717, 2
      %v1719 = vmax.f32 %v1717, %v1718
      %v1720 = vrot.slane %v1719, 1
      %v1721 = vmax.f32 %v1719, %v1720
      %v1722 = vsel %vm1714, %v1699, -inf
      %v1723 = vrot.slane %v1722, 4
      %v1724 = vmax.f32 %v1722, %v1723
      %v1725 = vrot.slane %v1724, 2
      %v1726 = vmax.f32 %v1724, %v1725
      %v1727 = vrot.slane %v1726, 1
      %v1728 = vmax.f32 %v1726, %v1727
      %v1729 = vsel %vm1714, %v1700, -inf
      %v1730 = vrot.slane %v1729, 4
      %v1731 = vmax.f32 %v1729, %v1730
      %v1732 = vrot.slane %v1731, 2
      %v1733 = vmax.f32 %v1731, %v1732
      %v1734 = vrot.slane %v1733, 1
      %v1735 = vmax.f32 %v1733, %v1734
      %v1736 = vsel %vm1714, %v1701, -inf
      %v1737 = vrot.slane %v1736, 4
      %v1738 = vmax.f32 %v1736, %v1737
      %v1739 = vrot.slane %v1738, 2
      %v1740 = vmax.f32 %v1738, %v1739
      %v1741 = vrot.slane %v1740, 1
      %v1742 = vmax.f32 %v1740, %v1741
      %v1743 = vsel %vm1714, %v1702, -inf
      %v1744 = vrot.slane %v1743, 4
      %v1745 = vmax.f32 %v1743, %v1744
      %v1746 = vrot.slane %v1745, 2
      %v1747 = vmax.f32 %v1745, %v1746
      %v1748 = vrot.slane %v1747, 1
      %v1749 = vmax.f32 %v1747, %v1748
      %v1750 = vsel %vm1714, %v1703, -inf
      %v1751 = vrot.slane %v1750, 4
      %v1752 = vmax.f32 %v1750, %v1751
      %v1753 = vrot.slane %v1752, 2
      %v1754 = vmax.f32 %v1752, %v1753
      %v1755 = vrot.slane %v1754, 1
      %v1756 = vmax.f32 %v1754, %v1755
      %v1757 = vsel %vm1714, %v1704, -inf
      %v1758 = vrot.slane %v1757, 4
      %v1759 = vmax.f32 %v1757, %v1758
      %v1760 = vrot.slane %v1759, 2
      %v1761 = vmax.f32 %v1759, %v1760
      %v1762 = vrot.slane %v1761, 1
      %v1763 = vmax.f32 %v1761, %v1762
      %v1764 = vsel %vm1714, %v1705, -inf
      %v1765 = vrot.slane %v1764, 4
      %v1766 = vmax.f32 %v1764, %v1765
      %v1767 = vrot.slane %v1766, 2
      %v1768 = vmax.f32 %v1766, %v1767
      %v1769 = vrot.slane %v1768, 1
      %v1770 = vmax.f32 %v1768, %v1769
      %v1771 = vsel %vm1714, %v1706, -inf
      %v1772 = vrot.slane %v1771, 4
      %v1773 = vmax.f32 %v1771, %v1772
      %v1774 = vrot.slane %v1773, 2
      %v1775 = vmax.f32 %v1773, %v1774
      %v1776 = vrot.slane %v1775, 1
      %v1777 = vmax.f32 %v1775, %v1776
      %v1778 = vsel %vm1714, %v1707, -inf
      %v1779 = vrot.slane %v1778, 4
      %v1780 = vmax.f32 %v1778, %v1779
      %v1781 = vrot.slane %v1780, 2
      %v1782 = vmax.f32 %v1780, %v1781
      %v1783 = vrot.slane %v1782, 1
      %v1784 = vmax.f32 %v1782, %v1783
      %v1785 = vsel %vm1714, %v1708, -inf
      %v1786 = vrot.slane %v1785, 4
      %v1787 = vmax.f32 %v1785, %v1786
      %v1788 = vrot.slane %v1787, 2
      %v1789 = vmax.f32 %v1787, %v1788
      %v1790 = vrot.slane %v1789, 1
      %v1791 = vmax.f32 %v1789, %v1790
      %v1792 = vsel %vm1714, %v1709, -inf
      %v1793 = vrot.slane %v1792, 4
      %v1794 = vmax.f32 %v1792, %v1793
      %v1795 = vrot.slane %v1794, 2
      %v1796 = vmax.f32 %v1794, %v1795
      %v1797 = vrot.slane %v1796, 1
      %v1798 = vmax.f32 %v1796, %v1797
      %v1799 = vsel %vm1714, %v1710, -inf
      %v1800 = vrot.slane %v1799, 4
      %v1801 = vmax.f32 %v1799, %v1800
      %v1802 = vrot.slane %v1801, 2
      %v1803 = vmax.f32 %v1801, %v1802
      %v1804 = vrot.slane %v1803, 1
      %v1805 = vmax.f32 %v1803, %v1804
      %v1806 = vsel %vm1714, %v1711, -inf
      %v1807 = vrot.slane %v1806, 4
      %v1808 = vmax.f32 %v1806, %v1807
      %v1809 = vrot.slane %v1808, 2
      %v1810 = vmax.f32 %v1808, %v1809
      %v1811 = vrot.slane %v1810, 1
      %v1812 = vmax.f32 %v1810, %v1811
      %v1813 = vsel %vm1714, %v1712, -inf
      %v1814 = vrot.slane %v1813, 4
      %v1815 = vmax.f32 %v1813, %v1814
      %v1816 = vrot.slane %v1815, 2
      %v1817 = vmax.f32 %v1815, %v1816
      %v1818 = vrot.slane %v1817, 1
      %v1819 = vmax.f32 %v1817, %v1818
      %v1820 = vsel %vm1714, %v1713, -inf
      %v1821 = vrot.slane %v1820, 4
      %v1822 = vmax.f32 %v1820, %v1821
      %v1823 = vrot.slane %v1822, 2
      %v1824 = vmax.f32 %v1822, %v1823
      %v1825 = vrot.slane %v1824, 1
      %v1826 = vmax.f32 %v1824, %v1825
      %vm1843 = vcmask 1041409
      %v1844 = vsel %vm1843, %v1728, %v1721
      %vm1845 = vcmask 1042434
      %v1846 = vsel %vm1845, %v1735, %v1844
      %vm1847 = vcmask 1043459
      %v1848 = vsel %vm1847, %v1742, %v1846
      %vm1849 = vcmask 1044484
      %v1850 = vsel %vm1849, %v1749, %v1848
      %vm1851 = vcmask 1045509
      %v1852 = vsel %vm1851, %v1756, %v1850
      %vm1853 = vcmask 1046534
      %v1854 = vsel %vm1853, %v1763, %v1852
      %vm1855 = vcmask 1047559
      %v1856 = vsel %vm1855, %v1770, %v1854
      %v1857 = vsel %vm1843, %v1784, %v1777
      %v1858 = vsel %vm1845, %v1791, %v1857
      %v1859 = vsel %vm1847, %v1798, %v1858
      %v1860 = vsel %vm1849, %v1805, %v1859
      %v1861 = vsel %vm1851, %v1812, %v1860
      %v1862 = vsel %vm1853, %v1819, %v1861
      %v1863 = vsel %vm1855, %v1826, %v1862
      %1866 = vst.msk [vmem:[%s389] sm:$0xff] %vm1714, %v1856
      %1867 = vst.msk [vmem:[%s389 + $0x8] sm:$0xff] %vm1714, %v1863
      %s1868 = smul.u32 2, %s28
      %p1869 = scmp.lt.s32.totalorder %s1868, 5
      %s1870 = scalar_select %p1869, %s1868, 5
      %s1871 = smul.addr %s1870, 8
      %s1872 = scalar_lea.vmem %s9, %s1871
      // Predicated region
      $region53: #{forward.2} parent=51 // pred_check
        %p1873 = pneg %p238
      $region54: #{forward.2} parent=51 // pred_check_branch
        %1875 = sbr.rel (%p1873) target = $region56
      $region55: #{forward.2} parent=51 // pred_region
        %s1876 = smul.u32 2, %s28
      $region56: #{forward.2} parent=51 // pred_fallthru
        _
    $region52: #{forward.2} parent=5 // pred_fallthru
      _
    %p1877 = scmp.le.s32.totalorder 2, %s23
    // Predicated region
    $region57: #{forward.2} parent=5 // pred_check
      %p1878 = pneg %p1877
    $region58: #{forward.2} parent=5 // pred_check_branch
      %1880 = sbr.rel (%p1878) target = $region60
    $region59: #{forward.2} parent=5 // pred_region
      %s1881 = ssub.s32 %s23, 2
      // Predicated region
      $region61: #{forward.2} parent=59 // pred_check
        %p1882 = pneg %p244
      $region62: #{forward.2} parent=59 // pred_check_branch
        %1884 = sbr.rel (%p1882) target = $region64
      $region63: #{forward.2} parent=59 // pred_region
        %s1885 = smul.u32 2, %s29
        %p1886 = scmp.lt.s32.totalorder %s1885, 5
        %s1887 = scalar_select %p1886, %s1885, 5
        %s1888 = smul.addr %s1887, 8
        %s1889 = scalar_lea.vmem %s9, %s1888
      $region64: #{forward.2} parent=59 // pred_fallthru
        _
    $region60: #{forward.2} parent=5 // pred_fallthru
      _
  $region6: #{forward.2} parent=0 // loop_footer
    %s27 = sadd.s32 1, %s23
  $region7: #{forward.2} parent=0 // loop_footer_branch
    %22 = sbr.rel target = $region3
  $region8: #{forward.2} parent=0 // loop_exit
    _

</llo_original>
